<compile_context>
chip_gen: v7x
topology: tpu7x:2x2x1
jax: 0.10.0
libtpu: 0.0.40
codegen_flags: <defaults>
</compile_context>

<pallas_src>
import jax
import jax.numpy as jnp
from jax.experimental import pallas as pl
from jax.experimental.pallas import tpu as pltpu

# --- module hyperparameters (from RoPE.py) ---
HIDDEN = 128
NUM_HEADS = 4
HEAD_DIM = HIDDEN // NUM_HEADS      # 32 (q/k/v head dim)
ROPE_DIM = 32                       # qk_rope_head_dim (== HEAD_DIM here)
LOW_RANK = 16                       # kv_low_rank_dim
SEQ = 5                             # seq_len
ROPE_BASE = 10000.0

# fused-layout constants
QK_W = 2 * HIDDEN                   # 256: [q | k] lanes (RoPE'd)
W1_W = 5 * HIDDEN                   # 640: [q | k | v | q_rot | k_rot]
LR_ALL = NUM_HEADS * LOW_RANK       # 64
QGQA_W = HIDDEN + LR_ALL            # 192: [qg | qa]


# ------------------ weight packing (plain JAX glue, runs ONCE) ------------------

def _rotate_half_perm():
    """(H, H) signed block-diag permutation P with  q @ P == per-head rotate_half(q)."""
    half = ROPE_DIM // 2
    eye = jnp.eye(half, dtype=jnp.float32)
    zero = jnp.zeros((half, half), jnp.float32)
    p_rope = jnp.block([[zero, eye], [-eye, zero]])            # (ROPE_DIM, ROPE_DIM)
    p_head = jnp.zeros((HEAD_DIM, HEAD_DIM), jnp.float32)
    p_head = p_head.at[:ROPE_DIM, :ROPE_DIM].set(p_rope)
    return jnp.kron(jnp.eye(NUM_HEADS, dtype=jnp.float32), p_head)   # (H, H)


def pack_params(params):
    """Fuse the per-module nn.Linear weights into lane-dense bf16 MXU slabs."""
    wq, wk, wv, wkc, wvc, wqa, wqg, wov, wo = params
    eye_h = jnp.eye(NUM_HEADS, dtype=jnp.float32)
    p_bd = _rotate_half_perm()
    scale = 1.0 / (LOW_RANK ** 0.5)          # folded into wqa (power of two -> exact)

    # W1: x @ W1 -> [q | k | v | rotate_half(q) | rotate_half(k)]   (no zero block)
    w1 = jnp.concatenate([wq, wk, wv, wq @ p_bd, wk @ p_bd], axis=1)   # (128, 640)

    # Block-diagonal per-head Linears (same per-head weight replicated on diagonal).
    wqg_bd = jnp.kron(eye_h, wqg)                    # (128, 128)
    wqa_bd = jnp.kron(eye_h, wqa) * scale            # (128, 64), scale pre-folded
    wq2 = jnp.concatenate([wqg_bd, wqa_bd], axis=1)  # (128, 192)  roped_q -> [qg|qa]
    wk2 = jnp.kron(eye_h, wkc)                       # (128, 64)   roped_k -> kc
    wv2 = jnp.kron(eye_h, wvc)                       # (128, 64)   v       -> vc
    wov_bd = jnp.kron(eye_h, wov)                    # (64, 128)

    bf = jnp.bfloat16
    return (w1.astype(bf), wq2.astype(bf), wk2.astype(bf), wv2.astype(bf),
            wov_bd.astype(bf), wo.astype(bf))


def prepare_rope(cos, sin, batch):
    """Lane-tile per-head cos/sin over [q heads | k heads] and batch rows.  Runs ONCE."""
    S = cos.shape[0]
    pad = HEAD_DIM - ROPE_DIM
    if pad:
        cos_h = jnp.concatenate([cos, jnp.ones((S, pad), jnp.float32)], axis=1)
        sin_h = jnp.concatenate([sin, jnp.zeros((S, pad), jnp.float32)], axis=1)
    else:
        cos_h, sin_h = cos, sin
    cos256 = jnp.tile(cos_h, (1, 2 * NUM_HEADS))     # (S, 256)
    sin256 = jnp.tile(sin_h, (1, 2 * NUM_HEADS))
    return jnp.tile(cos256, (batch, 1)), jnp.tile(sin256, (batch, 1))   # (R, 256)


# ------------------------------ fused kernel ------------------------------

def mla_forward(x, cos_full, sin_full, w1, wq2, wk2, wv2, wov_bd, wo):
    B, S, H = x.shape
    R = B * S
    x2 = x.reshape(R, H).astype(jnp.bfloat16)

    def mla_kernel(x_ref, cos_ref, sin_ref, w1_ref, wq2_ref, wk2_ref, wv2_ref,
                   wov_ref, wo_ref, o_ref):
        x_bf = x_ref[...]                                                   # (R, 128) bf16

        # 1) fused QKV + pre-rotated q/k projection: one bf16 MXU op -> f32 acc.
        big = jnp.dot(x_bf, w1_ref[...], preferred_element_type=jnp.float32)  # (R, 640)

        # 2) RoPE on the q|k lanes only; v lanes pass through untouched.
        qk = big[:, :QK_W]                                                  # (R, 256)
        v = big[:, QK_W:3 * HIDDEN]                                         # (R, 128)
        qk_rot = big[:, 3 * HIDDEN:W1_W]                                    # (R, 256)
        roped = qk * cos_ref[...] + qk_rot * sin_ref[...]                   # f32

        roped_q = roped[:, :HIDDEN].astype(jnp.bfloat16)                    # (R, 128)
        roped_k = roped[:, HIDDEN:].astype(jnp.bfloat16)                    # (R, 128)
        v_bf = v.astype(jnp.bfloat16)                                       # (R, 128)

        # 3) three dense block-diagonal matmuls (replaces the sparse 384x320 slab).
        qg_qa = jnp.dot(roped_q, wq2_ref[...], preferred_element_type=jnp.float32)  # (R,192)
        kc = jnp.dot(roped_k, wk2_ref[...], preferred_element_type=jnp.float32)     # (R, 64)
        vc = jnp.dot(v_bf, wv2_ref[...], preferred_element_type=jnp.float32)        # (R, 64)
        qg = qg_qa[:, :HIDDEN]                                              # (R, 128)
        qa = qg_qa[:, HIDDEN:]                                              # (R, 64), pre-scaled

        # 4) cross-batch mask built in-kernel (VPU iota + compares, no DMA).
        rowi = jax.lax.broadcasted_iota(jnp.int32, (R, R), 0)
        coli = jax.lax.broadcasted_iota(jnp.int32, (R, R), 1)

        def in_batch(idx, b):
            return (idx >= b * S) & (idx < (b + 1) * S)

        same = in_batch(rowi, 0) & in_batch(coli, 0)
        for b in range(1, B):
            same = same | (in_batch(rowi, b) & in_batch(coli, b))
        mask = jnp.where(same, 0.0, -1e9).astype(jnp.float32)               # (R, R)

        # 5) per-head attention in the compressed (LOW_RANK) space.
        head_ctx = []
        for h in range(NUM_HEADS):                                          # static unroll
            qa_h = qa[:, h * LOW_RANK:(h + 1) * LOW_RANK]                   # (R, 16) f32
            kc_h = kc[:, h * LOW_RANK:(h + 1) * LOW_RANK]
            vc_h = vc[:, h * LOW_RANK:(h + 1) * LOW_RANK]

            s = jax.lax.dot_general(qa_h, kc_h, (((1,), (1,)), ((), ())),
                                    preferred_element_type=jnp.float32)     # (R, R)
            s = s + mask
            s = s - jnp.max(s, axis=-1, keepdims=True)
            e = jnp.exp(s)
            denom = jnp.sum(e, axis=-1, keepdims=True)
            p = e * pl.reciprocal(denom, approx=True)                       # EUP
            head_ctx.append(jnp.dot(p, vc_h, preferred_element_type=jnp.float32))  # (R, 16)

        attn_c = jnp.concatenate(head_ctx, axis=-1).astype(jnp.bfloat16)    # (R, 64)

        # 6) block-diag o_v up-projection, SiLU gate, output projection, one store.
        uplift = jnp.dot(attn_c, wov_ref[...], preferred_element_type=jnp.float32)  # (R, 128)
        gated = (qg * jax.nn.sigmoid(qg)) * uplift                          # f32
        o_ref[...] = jnp.dot(gated.astype(jnp.bfloat16), wo_ref[...],
                             preferred_element_type=jnp.float32)

    def full_spec(shape):
        return pl.BlockSpec(shape, lambda i: (0,) * len(shape))

    out2 = pl.pallas_call(
        mla_kernel,
        out_shape=jax.ShapeDtypeStruct((R, H), jnp.float32),
        grid=(1,),
        in_specs=[
            full_spec((R, H)),            # x2 (bf16)
            full_spec((R, QK_W)),         # cos_full (f32)
            full_spec((R, QK_W)),         # sin_full (f32)
            full_spec((H, W1_W)),         # fused qkv(+rot) weight (bf16)
            full_spec((H, QGQA_W)),       # roped_q -> [qg|qa] block weight (bf16)
            full_spec((H, LR_ALL)),       # roped_k -> kc block weight (bf16)
            full_spec((H, LR_ALL)),       # v -> vc block weight (bf16)
            full_spec((LR_ALL, H)),       # block-diag o_v weight (bf16)
            full_spec((H, H)),            # output projection (bf16)
        ],
        out_specs=full_spec((R, H)),
        compiler_params=pltpu.CompilerParams(
            dimension_semantics=("arbitrary",)),
    )(x2, cos_full, sin_full, w1, wq2, wk2, wv2, wov_bd, wo)

    return out2.reshape(B, S, H)


# ------------------ parameter setup & RoPE tables (plain JAX glue) ------------------

def make_params(key):
    """Deterministic Linear weights, returned pre-transposed to (in, out)."""
    def linear_w(k, out_dim, in_dim):
        bound = 1.0 / (in_dim ** 0.5)
        w = jax.random.uniform(k, (out_dim, in_dim), jnp.float32, -bound, bound)
        return jnp.transpose(w)   # (in, out)

    keys = jax.random.split(key, 9)
    wq = linear_w(keys[0], HIDDEN, HIDDEN)
    wk = linear_w(keys[1], HIDDEN, HIDDEN)
    wv = linear_w(keys[2], HIDDEN, HIDDEN)
    wkc = linear_w(keys[3], LOW_RANK, HEAD_DIM)
    wvc = linear_w(keys[4], LOW_RANK, HEAD_DIM)
    wqa = linear_w(keys[5], LOW_RANK, HEAD_DIM)
    wqg = linear_w(keys[6], HEAD_DIM, HEAD_DIM)
    wov = linear_w(keys[7], HEAD_DIM, LOW_RANK)
    wo = linear_w(keys[8], HIDDEN, HIDDEN)
    return (wq, wk, wv, wkc, wvc, wqa, wqg, wov, wo)


def rope_tables(seq_len):
    # Mirrors DeepSeekRotaryEmbedding: cached cos/sin buffers sliced to seq_len.
    inv_freq = 1.0 / (ROPE_BASE ** (jnp.arange(0, ROPE_DIM, 2, dtype=jnp.float32) / ROPE_DIM))
    t = jnp.arange(seq_len, dtype=jnp.float32)
    freqs = jnp.einsum('i,j->ij', t, inv_freq)          # (S, ROPE_DIM/2)
    emb = jnp.concatenate([freqs, freqs], axis=-1)      # (S, ROPE_DIM)
    return jnp.cos(emb), jnp.sin(emb)


# ------------------ pure-JAX reference for correctness check ------------------

def ref_forward(x, cos, sin, params):
    wq, wk, wv, wkc, wvc, wqa, wqg, wov, wo = params
    bs, S, H = x.shape
    q = (x @ wq).reshape(bs, S, NUM_HEADS, HEAD_DIM)
    k = (x @ wk).reshape(bs, S, NUM_HEADS, HEAD_DIM)
    v = (x @ wv).reshape(bs, S, NUM_HEADS, HEAD_DIM)
    c = cos[None, :, None, :]
    s = sin[None, :, None, :]

    def rot(t):
        half = t.shape[-1] // 2
        return jnp.concatenate([-t[..., half:], t[..., :half]], axis=-1)

    q = q.at[..., :ROPE_DIM].set(q[..., :ROPE_DIM] * c + rot(q[..., :ROPE_DIM]) * s)
    k = k.at[..., :ROPE_DIM].set(k[..., :ROPE_DIM] * c + rot(k[..., :ROPE_DIM]) * s)
    kc = k @ wkc
    vc = v @ wvc
    qa = q @ wqa
    qg = q @ wqg
    attn = jnp.einsum('bqhl,bkhl->bhqk', qa, kc) / (LOW_RANK ** 0.5)
    attn = jax.nn.softmax(attn.astype(jnp.float32), axis=-1)
    ac = jnp.einsum('bhqk,bkhl->bhql', attn, vc)
    up = jnp.transpose(ac @ wov, (0, 2, 1, 3))          # (b, S, heads, head_dim)
    gated = jax.nn.silu(qg) * up
    gated = gated.reshape(bs, S, H)
    return gated @ wo


if __name__ == "__main__":
    key = jax.random.PRNGKey(0)
    k_x, k_w = jax.random.split(key)

    bs = 2
    x = jax.random.normal(k_x, (bs, SEQ, HIDDEN), jnp.float32)
    params = make_params(k_w)
    cos, sin = rope_tables(SEQ)

    # Hoisted one-time packing / tiling (not in the per-call path).
    packed = pack_params(params)
    cos_full, sin_full = prepare_rope(cos, sin, bs)

    fwd = jax.jit(mla_forward)
    out = fwd(x, cos_full, sin_full, *packed)
    out = jax.block_until_ready(out)

    ref = ref_forward(x, cos, sin, params)
    assert out.shape == (bs, SEQ, HIDDEN)
    # bf16 matmul operands (f32 accumulation) -> compare against the f32 reference
    # with a bf16-appropriate tolerance.
    assert jnp.allclose(out, ref, atol=2e-2, rtol=2e-2), (
        f"max abs diff = {jnp.max(jnp.abs(out - ref))}")

    print("KERNEL_OK")
</pallas_src>

<mosaic_0001>
module attributes {stable_mosaic.version = 11 : i64} {
  func.func @mla_kernel(%arg0: i32, %arg1: memref<10x128xbf16, #tpu.memory_space<vmem>>, %arg2: memref<10x256xf32, #tpu.memory_space<vmem>>, %arg3: memref<10x256xf32, #tpu.memory_space<vmem>>, %arg4: memref<128x640xbf16, #tpu.memory_space<vmem>>, %arg5: memref<128x192xbf16, #tpu.memory_space<vmem>>, %arg6: memref<128x64xbf16, #tpu.memory_space<vmem>>, %arg7: memref<128x64xbf16, #tpu.memory_space<vmem>>, %arg8: memref<64x128xbf16, #tpu.memory_space<vmem>>, %arg9: memref<128x128xbf16, #tpu.memory_space<vmem>>, %arg10: memref<10x128xf32, #tpu.memory_space<vmem>>) attributes {dimension_semantics = [#tpu.dimension_semantics<arbitrary>], iteration_bounds = array<i64: 1>, scalar_prefetch = 0 : i64, scratch_operands = 0 : i64, tpu.core_type = #tpu.core_type<tc>, window_params = [{pipeline_mode = #tpu.pipeline_mode<synchronous>, transform_indices = @transform_0, window_bounds = array<i64: 10, 128>}, {pipeline_mode = #tpu.pipeline_mode<synchronous>, transform_indices = @transform_1, window_bounds = array<i64: 10, 256>}, {pipeline_mode = #tpu.pipeline_mode<synchronous>, transform_indices = @transform_2, window_bounds = array<i64: 10, 256>}, {pipeline_mode = #tpu.pipeline_mode<synchronous>, transform_indices = @transform_3, window_bounds = array<i64: 128, 640>}, {pipeline_mode = #tpu.pipeline_mode<synchronous>, transform_indices = @transform_4, window_bounds = array<i64: 128, 192>}, {pipeline_mode = #tpu.pipeline_mode<synchronous>, transform_indices = @transform_5, window_bounds = array<i64: 128, 64>}, {pipeline_mode = #tpu.pipeline_mode<synchronous>, transform_indices = @transform_6, window_bounds = array<i64: 128, 64>}, {pipeline_mode = #tpu.pipeline_mode<synchronous>, transform_indices = @transform_7, window_bounds = array<i64: 64, 128>}, {pipeline_mode = #tpu.pipeline_mode<synchronous>, transform_indices = @transform_8, window_bounds = array<i64: 128, 128>}, {pipeline_mode = #tpu.pipeline_mode<synchronous>, transform_indices = @transform_9, window_bounds = array<i64: 10, 128>}]} {
    %c0 = arith.constant 0 : index
    %c0_0 = arith.constant 0 : index
    %0 = vector.load %arg1[%c0, %c0_0] : memref<10x128xbf16, #tpu.memory_space<vmem>>, vector<10x128xbf16>
    %c0_1 = arith.constant 0 : index
    %c0_2 = arith.constant 0 : index
    %1 = vector.load %arg4[%c0_1, %c0_2] : memref<128x640xbf16, #tpu.memory_space<vmem>>, vector<128x640xbf16>
    %cst = arith.constant dense<0.000000e+00> : vector<10x640xf32>
    %2 = tpu.matmul %0, %1, %cst {dimension_numbers = #tpu.dot_dimension_numbers<[1], [0], [0], [1], [0, 0, 1, 1], [], []>} : vector<10x128xbf16>, vector<128x640xbf16>, vector<10x640xf32> -> vector<10x640xf32>
    %3 = vector.extract_strided_slice %2 {offsets = [0, 0], sizes = [10, 256], strides = [1, 1]} : vector<10x640xf32> to vector<10x256xf32>
    %4 = vector.extract_strided_slice %2 {offsets = [0, 256], sizes = [10, 128], strides = [1, 1]} : vector<10x640xf32> to vector<10x128xf32>
    %5 = vector.extract_strided_slice %2 {offsets = [0, 384], sizes = [10, 256], strides = [1, 1]} : vector<10x640xf32> to vector<10x256xf32>
    %c0_3 = arith.constant 0 : index
    %c0_4 = arith.constant 0 : index
    %6 = vector.load %arg2[%c0_3, %c0_4] : memref<10x256xf32, #tpu.memory_space<vmem>>, vector<10x256xf32>
    %7 = arith.mulf %3, %6 : vector<10x256xf32>
    %c0_5 = arith.constant 0 : index
    %c0_6 = arith.constant 0 : index
    %8 = vector.load %arg3[%c0_5, %c0_6] : memref<10x256xf32, #tpu.memory_space<vmem>>, vector<10x256xf32>
    %9 = arith.mulf %5, %8 : vector<10x256xf32>
    %10 = arith.addf %7, %9 : vector<10x256xf32>
    %11 = vector.extract_strided_slice %10 {offsets = [0, 0], sizes = [10, 128], strides = [1, 1]} : vector<10x256xf32> to vector<10x128xf32>
    %12 = arith.truncf %11 : vector<10x128xf32> to vector<10x128xbf16>
    %13 = vector.extract_strided_slice %10 {offsets = [0, 128], sizes = [10, 128], strides = [1, 1]} : vector<10x256xf32> to vector<10x128xf32>
    %14 = arith.truncf %13 : vector<10x128xf32> to vector<10x128xbf16>
    %15 = arith.truncf %4 : vector<10x128xf32> to vector<10x128xbf16>
    %c0_7 = arith.constant 0 : index
    %c0_8 = arith.constant 0 : index
    %16 = vector.load %arg5[%c0_7, %c0_8] : memref<128x192xbf16, #tpu.memory_space<vmem>>, vector<128x192xbf16>
    %cst_9 = arith.constant dense<0.000000e+00> : vector<10x192xf32>
    %17 = tpu.matmul %12, %16, %cst_9 {dimension_numbers = #tpu.dot_dimension_numbers<[1], [0], [0], [1], [0, 0, 1, 1], [], []>} : vector<10x128xbf16>, vector<128x192xbf16>, vector<10x192xf32> -> vector<10x192xf32>
    %c0_10 = arith.constant 0 : index
    %c0_11 = arith.constant 0 : index
    %18 = vector.load %arg6[%c0_10, %c0_11] : memref<128x64xbf16, #tpu.memory_space<vmem>>, vector<128x64xbf16>
    %cst_12 = arith.constant dense<0.000000e+00> : vector<10x64xf32>
    %19 = tpu.matmul %14, %18, %cst_12 {dimension_numbers = #tpu.dot_dimension_numbers<[1], [0], [0], [1], [0, 0, 1, 1], [], []>} : vector<10x128xbf16>, vector<128x64xbf16>, vector<10x64xf32> -> vector<10x64xf32>
    %c0_13 = arith.constant 0 : index
    %c0_14 = arith.constant 0 : index
    %20 = vector.load %arg7[%c0_13, %c0_14] : memref<128x64xbf16, #tpu.memory_space<vmem>>, vector<128x64xbf16>
    %cst_15 = arith.constant dense<0.000000e+00> : vector<10x64xf32>
    %21 = tpu.matmul %15, %20, %cst_15 {dimension_numbers = #tpu.dot_dimension_numbers<[1], [0], [0], [1], [0, 0, 1, 1], [], []>} : vector<10x128xbf16>, vector<128x64xbf16>, vector<10x64xf32> -> vector<10x64xf32>
    %22 = vector.extract_strided_slice %17 {offsets = [0, 0], sizes = [10, 128], strides = [1, 1]} : vector<10x192xf32> to vector<10x128xf32>
    %23 = vector.extract_strided_slice %17 {offsets = [0, 128], sizes = [10, 64], strides = [1, 1]} : vector<10x192xf32> to vector<10x64xf32>
    %24 = tpu.iota {dimensions = array<i32: 0>} : vector<10x10xi32>
    %25 = tpu.iota {dimensions = array<i32: 1>} : vector<10x10xi32>
    %c0_i32 = arith.constant 0 : i32
    %26 = vector.broadcast %c0_i32 : i32 to vector<10x10xi32>
    %27 = arith.cmpi sge, %24, %26 : vector<10x10xi32>
    %c5_i32 = arith.constant 5 : i32
    %28 = vector.broadcast %c5_i32 : i32 to vector<10x10xi32>
    %29 = arith.cmpi slt, %24, %28 : vector<10x10xi32>
    %30 = arith.andi %27, %29 : vector<10x10xi1>
    %c0_i32_16 = arith.constant 0 : i32
    %31 = vector.broadcast %c0_i32_16 : i32 to vector<10x10xi32>
    %32 = arith.cmpi sge, %25, %31 : vector<10x10xi32>
    %c5_i32_17 = arith.constant 5 : i32
    %33 = vector.broadcast %c5_i32_17 : i32 to vector<10x10xi32>
    %34 = arith.cmpi slt, %25, %33 : vector<10x10xi32>
    %35 = arith.andi %32, %34 : vector<10x10xi1>
    %36 = arith.andi %30, %35 : vector<10x10xi1>
    %c5_i32_18 = arith.constant 5 : i32
    %37 = vector.broadcast %c5_i32_18 : i32 to vector<10x10xi32>
    %38 = arith.cmpi sge, %24, %37 : vector<10x10xi32>
    %c10_i32 = arith.constant 10 : i32
    %39 = vector.broadcast %c10_i32 : i32 to vector<10x10xi32>
    %40 = arith.cmpi slt, %24, %39 : vector<10x10xi32>
    %41 = arith.andi %38, %40 : vector<10x10xi1>
    %c5_i32_19 = arith.constant 5 : i32
    %42 = vector.broadcast %c5_i32_19 : i32 to vector<10x10xi32>
    %43 = arith.cmpi sge, %25, %42 : vector<10x10xi32>
    %c10_i32_20 = arith.constant 10 : i32
    %44 = vector.broadcast %c10_i32_20 : i32 to vector<10x10xi32>
    %45 = arith.cmpi slt, %25, %44 : vector<10x10xi32>
    %46 = arith.andi %43, %45 : vector<10x10xi1>
    %47 = arith.andi %41, %46 : vector<10x10xi1>
    %48 = arith.ori %36, %47 : vector<10x10xi1>
    %cst_21 = arith.constant 0.000000e+00 : f32
    %cst_22 = arith.constant -1.000000e+09 : f32
    %49 = vector.broadcast %cst_21 : f32 to vector<10x10xf32>
    %50 = vector.broadcast %cst_22 : f32 to vector<10x10xf32>
    %51 = arith.select %48, %49, %50 : vector<10x10xi1>, vector<10x10xf32>
    %52 = vector.extract_strided_slice %23 {offsets = [0, 0], sizes = [10, 16], strides = [1, 1]} : vector<10x64xf32> to vector<10x16xf32>
    %53 = vector.extract_strided_slice %19 {offsets = [0, 0], sizes = [10, 16], strides = [1, 1]} : vector<10x64xf32> to vector<10x16xf32>
    %54 = vector.extract_strided_slice %21 {offsets = [0, 0], sizes = [10, 16], strides = [1, 1]} : vector<10x64xf32> to vector<10x16xf32>
    %cst_23 = arith.constant dense<0.000000e+00> : vector<10x10xf32>
    %55 = tpu.matmul %52, %53, %cst_23 {dimension_numbers = #tpu.dot_dimension_numbers<[1], [1], [0], [0], [0, 0, 1, 0], [], []>} : vector<10x16xf32>, vector<10x16xf32>, vector<10x10xf32> -> vector<10x10xf32>
    %56 = arith.addf %55, %51 : vector<10x10xf32>
    %cst_24 = arith.constant dense<0xFF800000> : vector<10xf32>
    %57 = vector.multi_reduction <maximumf>, %56, %cst_24 [1] : vector<10x10xf32> to vector<10xf32>
    %58 = vector.shape_cast %57 : vector<10xf32> to vector<10x1xf32>
    %59 = vector.broadcast %58 : vector<10x1xf32> to vector<10x10xf32>
    %60 = arith.subf %56, %59 : vector<10x10xf32>
    %61 = math.exp %60 : vector<10x10xf32>
    %cst_25 = arith.constant dense<0.000000e+00> : vector<10xf32>
    %62 = vector.multi_reduction <add>, %61, %cst_25 [1] : vector<10x10xf32> to vector<10xf32>
    %63 = vector.shape_cast %62 : vector<10xf32> to vector<10x1xf32>
    %64 = tpu.reciprocal %63 {approx = true} : vector<10x1xf32> -> vector<10x1xf32>
    %65 = vector.broadcast %64 : vector<10x1xf32> to vector<10x10xf32>
    %66 = arith.mulf %61, %65 : vector<10x10xf32>
    %cst_26 = arith.constant dense<0.000000e+00> : vector<10x16xf32>
    %67 = tpu.matmul %66, %54, %cst_26 {dimension_numbers = #tpu.dot_dimension_numbers<[1], [0], [0], [1], [0, 0, 1, 1], [], []>} : vector<10x10xf32>, vector<10x16xf32>, vector<10x16xf32> -> vector<10x16xf32>
    %68 = vector.extract_strided_slice %23 {offsets = [0, 16], sizes = [10, 16], strides = [1, 1]} : vector<10x64xf32> to vector<10x16xf32>
    %69 = vector.extract_strided_slice %19 {offsets = [0, 16], sizes = [10, 16], strides = [1, 1]} : vector<10x64xf32> to vector<10x16xf32>
    %70 = vector.extract_strided_slice %21 {offsets = [0, 16], sizes = [10, 16], strides = [1, 1]} : vector<10x64xf32> to vector<10x16xf32>
    %cst_27 = arith.constant dense<0.000000e+00> : vector<10x10xf32>
    %71 = tpu.matmul %68, %69, %cst_27 {dimension_numbers = #tpu.dot_dimension_numbers<[1], [1], [0], [0], [0, 0, 1, 0], [], []>} : vector<10x16xf32>, vector<10x16xf32>, vector<10x10xf32> -> vector<10x10xf32>
    %72 = arith.addf %71, %51 : vector<10x10xf32>
    %cst_28 = arith.constant dense<0xFF800000> : vector<10xf32>
    %73 = vector.multi_reduction <maximumf>, %72, %cst_28 [1] : vector<10x10xf32> to vector<10xf32>
    %74 = vector.shape_cast %73 : vector<10xf32> to vector<10x1xf32>
    %75 = vector.broadcast %74 : vector<10x1xf32> to vector<10x10xf32>
    %76 = arith.subf %72, %75 : vector<10x10xf32>
    %77 = math.exp %76 : vector<10x10xf32>
    %cst_29 = arith.constant dense<0.000000e+00> : vector<10xf32>
    %78 = vector.multi_reduction <add>, %77, %cst_29 [1] : vector<10x10xf32> to vector<10xf32>
    %79 = vector.shape_cast %78 : vector<10xf32> to vector<10x1xf32>
    %80 = tpu.reciprocal %79 {approx = true} : vector<10x1xf32> -> vector<10x1xf32>
    %81 = vector.broadcast %80 : vector<10x1xf32> to vector<10x10xf32>
    %82 = arith.mulf %77, %81 : vector<10x10xf32>
    %cst_30 = arith.constant dense<0.000000e+00> : vector<10x16xf32>
    %83 = tpu.matmul %82, %70, %cst_30 {dimension_numbers = #tpu.dot_dimension_numbers<[1], [0], [0], [1], [0, 0, 1, 1], [], []>} : vector<10x10xf32>, vector<10x16xf32>, vector<10x16xf32> -> vector<10x16xf32>
    %84 = vector.extract_strided_slice %23 {offsets = [0, 32], sizes = [10, 16], strides = [1, 1]} : vector<10x64xf32> to vector<10x16xf32>
    %85 = vector.extract_strided_slice %19 {offsets = [0, 32], sizes = [10, 16], strides = [1, 1]} : vector<10x64xf32> to vector<10x16xf32>
    %86 = vector.extract_strided_slice %21 {offsets = [0, 32], sizes = [10, 16], strides = [1, 1]} : vector<10x64xf32> to vector<10x16xf32>
    %cst_31 = arith.constant dense<0.000000e+00> : vector<10x10xf32>
    %87 = tpu.matmul %84, %85, %cst_31 {dimension_numbers = #tpu.dot_dimension_numbers<[1], [1], [0], [0], [0, 0, 1, 0], [], []>} : vector<10x16xf32>, vector<10x16xf32>, vector<10x10xf32> -> vector<10x10xf32>
    %88 = arith.addf %87, %51 : vector<10x10xf32>
    %cst_32 = arith.constant dense<0xFF800000> : vector<10xf32>
    %89 = vector.multi_reduction <maximumf>, %88, %cst_32 [1] : vector<10x10xf32> to vector<10xf32>
    %90 = vector.shape_cast %89 : vector<10xf32> to vector<10x1xf32>
    %91 = vector.broadcast %90 : vector<10x1xf32> to vector<10x10xf32>
    %92 = arith.subf %88, %91 : vector<10x10xf32>
    %93 = math.exp %92 : vector<10x10xf32>
    %cst_33 = arith.constant dense<0.000000e+00> : vector<10xf32>
    %94 = vector.multi_reduction <add>, %93, %cst_33 [1] : vector<10x10xf32> to vector<10xf32>
    %95 = vector.shape_cast %94 : vector<10xf32> to vector<10x1xf32>
    %96 = tpu.reciprocal %95 {approx = true} : vector<10x1xf32> -> vector<10x1xf32>
    %97 = vector.broadcast %96 : vector<10x1xf32> to vector<10x10xf32>
    %98 = arith.mulf %93, %97 : vector<10x10xf32>
    %cst_34 = arith.constant dense<0.000000e+00> : vector<10x16xf32>
    %99 = tpu.matmul %98, %86, %cst_34 {dimension_numbers = #tpu.dot_dimension_numbers<[1], [0], [0], [1], [0, 0, 1, 1], [], []>} : vector<10x10xf32>, vector<10x16xf32>, vector<10x16xf32> -> vector<10x16xf32>
    %100 = vector.extract_strided_slice %23 {offsets = [0, 48], sizes = [10, 16], strides = [1, 1]} : vector<10x64xf32> to vector<10x16xf32>
    %101 = vector.extract_strided_slice %19 {offsets = [0, 48], sizes = [10, 16], strides = [1, 1]} : vector<10x64xf32> to vector<10x16xf32>
    %102 = vector.extract_strided_slice %21 {offsets = [0, 48], sizes = [10, 16], strides = [1, 1]} : vector<10x64xf32> to vector<10x16xf32>
    %cst_35 = arith.constant dense<0.000000e+00> : vector<10x10xf32>
    %103 = tpu.matmul %100, %101, %cst_35 {dimension_numbers = #tpu.dot_dimension_numbers<[1], [1], [0], [0], [0, 0, 1, 0], [], []>} : vector<10x16xf32>, vector<10x16xf32>, vector<10x10xf32> -> vector<10x10xf32>
    %104 = arith.addf %103, %51 : vector<10x10xf32>
    %cst_36 = arith.constant dense<0xFF800000> : vector<10xf32>
    %105 = vector.multi_reduction <maximumf>, %104, %cst_36 [1] : vector<10x10xf32> to vector<10xf32>
    %106 = vector.shape_cast %105 : vector<10xf32> to vector<10x1xf32>
    %107 = vector.broadcast %106 : vector<10x1xf32> to vector<10x10xf32>
    %108 = arith.subf %104, %107 : vector<10x10xf32>
    %109 = math.exp %108 : vector<10x10xf32>
    %cst_37 = arith.constant dense<0.000000e+00> : vector<10xf32>
    %110 = vector.multi_reduction <add>, %109, %cst_37 [1] : vector<10x10xf32> to vector<10xf32>
    %111 = vector.shape_cast %110 : vector<10xf32> to vector<10x1xf32>
    %112 = tpu.reciprocal %111 {approx = true} : vector<10x1xf32> -> vector<10x1xf32>
    %113 = vector.broadcast %112 : vector<10x1xf32> to vector<10x10xf32>
    %114 = arith.mulf %109, %113 : vector<10x10xf32>
    %cst_38 = arith.constant dense<0.000000e+00> : vector<10x16xf32>
    %115 = tpu.matmul %114, %102, %cst_38 {dimension_numbers = #tpu.dot_dimension_numbers<[1], [0], [0], [1], [0, 0, 1, 1], [], []>} : vector<10x10xf32>, vector<10x16xf32>, vector<10x16xf32> -> vector<10x16xf32>
    %116 = tpu.concatenate %67, %83, %99, %115 in 1 : vector<10x16xf32>, vector<10x16xf32>, vector<10x16xf32>, vector<10x16xf32> -> vector<10x64xf32>
    %117 = arith.truncf %116 : vector<10x64xf32> to vector<10x64xbf16>
    %c0_39 = arith.constant 0 : index
    %c0_40 = arith.constant 0 : index
    %118 = vector.load %arg8[%c0_39, %c0_40] : memref<64x128xbf16, #tpu.memory_space<vmem>>, vector<64x128xbf16>
    %cst_41 = arith.constant dense<0.000000e+00> : vector<10x128xf32>
    %119 = tpu.matmul %117, %118, %cst_41 {dimension_numbers = #tpu.dot_dimension_numbers<[1], [0], [0], [1], [0, 0, 1, 1], [], []>} : vector<10x64xbf16>, vector<64x128xbf16>, vector<10x128xf32> -> vector<10x128xf32>
    %120 = arith.negf %22 : vector<10x128xf32>
    %121 = math.exp %120 : vector<10x128xf32>
    %cst_42 = arith.constant 1.000000e+00 : f32
    %122 = vector.broadcast %cst_42 : f32 to vector<10x128xf32>
    %123 = arith.addf %122, %121 : vector<10x128xf32>
    %124 = arith.divf %122, %123 : vector<10x128xf32>
    %125 = arith.mulf %22, %124 : vector<10x128xf32>
    %126 = arith.mulf %125, %119 : vector<10x128xf32>
    %127 = arith.truncf %126 : vector<10x128xf32> to vector<10x128xbf16>
    %c0_43 = arith.constant 0 : index
    %c0_44 = arith.constant 0 : index
    %128 = vector.load %arg9[%c0_43, %c0_44] : memref<128x128xbf16, #tpu.memory_space<vmem>>, vector<128x128xbf16>
    %cst_45 = arith.constant dense<0.000000e+00> : vector<10x128xf32>
    %129 = tpu.matmul %127, %128, %cst_45 {dimension_numbers = #tpu.dot_dimension_numbers<[1], [0], [0], [1], [0, 0, 1, 1], [], []>} : vector<10x128xbf16>, vector<128x128xbf16>, vector<10x128xf32> -> vector<10x128xf32>
    %c0_46 = arith.constant 0 : index
    %c0_47 = arith.constant 0 : index
    %130 = vector.load %arg10[%c0_46, %c0_47] : memref<10x128xf32, #tpu.memory_space<vmem>>, vector<10x128xf32>
    tpu.vector_store %arg10[%c0_46, %c0_47], %129 {strides = array<i32>} : memref<10x128xf32, #tpu.memory_space<vmem>>, vector<10x128xf32>,
    return
  }
  func.func @transform_0(%arg0: i32) -> (i32, i32) {
    %c0_i32 = arith.constant 0 : i32
    %c0_i32_0 = arith.constant 0 : i32
    %c0_i32_1 = arith.constant 0 : i32
    return %c0_i32, %c0_i32_0 : i32, i32
  }
  func.func @transform_1(%arg0: i32) -> (i32, i32) {
    %c0_i32 = arith.constant 0 : i32
    %c0_i32_0 = arith.constant 0 : i32
    %c0_i32_1 = arith.constant 0 : i32
    return %c0_i32, %c0_i32_0 : i32, i32
  }
  func.func @transform_2(%arg0: i32) -> (i32, i32) {
    %c0_i32 = arith.constant 0 : i32
    %c0_i32_0 = arith.constant 0 : i32
    %c0_i32_1 = arith.constant 0 : i32
    return %c0_i32, %c0_i32_0 : i32, i32
  }
  func.func @transform_3(%arg0: i32) -> (i32, i32) {
    %c0_i32 = arith.constant 0 : i32
    %c0_i32_0 = arith.constant 0 : i32
    %c0_i32_1 = arith.constant 0 : i32
    return %c0_i32, %c0_i32_0 : i32, i32
  }
  func.func @transform_4(%arg0: i32) -> (i32, i32) {
    %c0_i32 = arith.constant 0 : i32
    %c0_i32_0 = arith.constant 0 : i32
    %c0_i32_1 = arith.constant 0 : i32
    return %c0_i32, %c0_i32_0 : i32, i32
  }
  func.func @transform_5(%arg0: i32) -> (i32, i32) {
    %c0_i32 = arith.constant 0 : i32
    %c0_i32_0 = arith.constant 0 : i32
    %c0_i32_1 = arith.constant 0 : i32
    return %c0_i32, %c0_i32_0 : i32, i32
  }
  func.func @transform_6(%arg0: i32) -> (i32, i32) {
    %c0_i32 = arith.constant 0 : i32
    %c0_i32_0 = arith.constant 0 : i32
    %c0_i32_1 = arith.constant 0 : i32
    return %c0_i32, %c0_i32_0 : i32, i32
  }
  func.func @transform_7(%arg0: i32) -> (i32, i32) {
    %c0_i32 = arith.constant 0 : i32
    %c0_i32_0 = arith.constant 0 : i32
    %c0_i32_1 = arith.constant 0 : i32
    return %c0_i32, %c0_i32_0 : i32, i32
  }
  func.func @transform_8(%arg0: i32) -> (i32, i32) {
    %c0_i32 = arith.constant 0 : i32
    %c0_i32_0 = arith.constant 0 : i32
    %c0_i32_1 = arith.constant 0 : i32
    return %c0_i32, %c0_i32_0 : i32, i32
  }
  func.func @transform_9(%arg0: i32) -> (i32, i32) {
    %c0_i32 = arith.constant 0 : i32
    %c0_i32_0 = arith.constant 0 : i32
    %c0_i32_1 = arith.constant 0 : i32
    return %c0_i32, %c0_i32_0 : i32, i32
  }
}

</mosaic_0001>

<llo_original>
// kernel: mla_forward.1
$region0: #{mla_forward.1}
  #allocation0 [shape = 'u32[]', space=smem, size = 0x4, offset = 0x4, fixed_abs, tag = 'smem constant byte address 0x4 - core index']
  #allocation1 [shape = 'u32[144,128]{1,0:T(1,128)}', space=vmem, size = 0x12000, scoped, tag = 'internal scratch']
  %s0 = inlined_call_operand.vmem [shape: bf16[10,128], index: 0, kind: input, shape index: {}]
  %s1 = inlined_call_operand.hbm [shape: f32[10,256], index: 1, kind: input, shape index: {}]
  %s2 = inlined_call_operand.hbm [shape: f32[10,256], index: 2, kind: input, shape index: {}]
  %s3 = inlined_call_operand.vmem [shape: bf16[128,640], index: 3, kind: input, shape index: {}]
  %s4 = inlined_call_operand.vmem [shape: bf16[128,192], index: 4, kind: input, shape index: {}]
  %s5 = inlined_call_operand.vmem [shape: bf16[128,64], index: 5, kind: input, shape index: {}]
  %s6 = inlined_call_operand.vmem [shape: bf16[128,64], index: 6, kind: input, shape index: {}]
  %s7 = inlined_call_operand.hbm [shape: bf16[64,128], index: 7, kind: input, shape index: {}]
  %s8 = inlined_call_operand.vmem [shape: bf16[128,128], index: 8, kind: input, shape index: {}]
  %s9 = inlined_call_operand.vmem [shape: f32[10,128], index: 9, kind: output, shape index: {}]
  %s10 = sld [smem:[#allocation0]]
  $region58: #{mla_forward.1} parent=0
    _
  %s12 = ssub.s32 1, %s10
  %s13 = scalar_select 0, %s12, %s10
  $region1: #{mla_forward.1} parent=0
    #allocation2 [shape = 'u8[16384]{0}', space=vmem, size = 0x4000, scoped, tag = 'input window, operand 1, single buffered']
    #allocation3 [shape = 's32[1]{0}', space=sflag, size = 0x4, scoped, tag = 'scoped memory for mla_forward.1']
    #allocation4 [shape = 'u8[16384]{0}', space=vmem, size = 0x4000, scoped, tag = 'input window, operand 2, single buffered']
    #allocation5 [shape = 's32[1]{0}', space=sflag, size = 0x4, scoped, tag = 'scoped memory for mla_forward.1']
    #allocation6 [shape = 'u8[16384]{0}', space=vmem, size = 0x4000, scoped, tag = 'input window, operand 7, single buffered']
    %14 = vsyncpa [#allocation3], 0
    %15 = vsyncpa [#allocation5], 0
    // Predicated region
    $region2: #{mla_forward.1} parent=1 // pred_check
      _
    $region3: #{mla_forward.1} parent=1 // pred_check_branch
      %17 = sbr.rel (0) target = $region5
    $region4: #{mla_forward.1} parent=1 // pred_region
      _
    $region5: #{mla_forward.1} parent=1 // pred_fallthru
      _
    // Predicated region
    $region6: #{mla_forward.1} parent=1 // pred_check
      _
    $region7: #{mla_forward.1} parent=1 // pred_check_branch
      %19 = sbr.rel (0) target = $region9
    $region8: #{mla_forward.1} parent=1 // pred_region
      %s21 = ssub.s32 512, 512
      %22 = vsyncadd [#allocation3], %s21
      %s23 = sshll.u32 [#allocation2], 4
      %s24 = int_to_ptr.vmem [resolvable:$true] %s23
      %29 = dma.hbm_to_vmem [thread:$0]  %s1, 512, %s24, [#allocation3], 256, 256, 16
    $region9: #{mla_forward.1} parent=1 // pred_fallthru
      _
    // Predicated region
    $region10: #{mla_forward.1} parent=1 // pred_check
      _
    $region11: #{mla_forward.1} parent=1 // pred_check_branch
      %31 = sbr.rel (0) target = $region13
    $region12: #{mla_forward.1} parent=1 // pred_region
      %s33 = ssub.s32 512, 512
      %34 = vsyncadd [#allocation5], %s33
      %s35 = sshll.u32 [#allocation4], 4
      %s36 = int_to_ptr.vmem [resolvable:$true] %s35
      %41 = dma.hbm_to_vmem [thread:$0]  %s2, 512, %s36, [#allocation5], 256, 256, 16
    $region13: #{mla_forward.1} parent=1 // pred_fallthru
      _
    // Predicated region
    $region14: #{mla_forward.1} parent=1 // pred_check
      _
    $region15: #{mla_forward.1} parent=1 // pred_check_branch
      %43 = sbr.rel (0) target = $region17
    $region16: #{mla_forward.1} parent=1 // pred_region
      _
    $region17: #{mla_forward.1} parent=1 // pred_fallthru
      _
    // Predicated region
    $region18: #{mla_forward.1} parent=1 // pred_check
      _
    $region19: #{mla_forward.1} parent=1 // pred_check_branch
      %45 = sbr.rel (0) target = $region21
    $region20: #{mla_forward.1} parent=1 // pred_region
      _
    $region21: #{mla_forward.1} parent=1 // pred_fallthru
      _
    // Predicated region
    $region22: #{mla_forward.1} parent=1 // pred_check
      _
    $region23: #{mla_forward.1} parent=1 // pred_check_branch
      %47 = sbr.rel (0) target = $region25
    $region24: #{mla_forward.1} parent=1 // pred_region
      _
    $region25: #{mla_forward.1} parent=1 // pred_fallthru
      _
    // Predicated region
    $region26: #{mla_forward.1} parent=1 // pred_check
      _
    $region27: #{mla_forward.1} parent=1 // pred_check_branch
      %49 = sbr.rel (0) target = $region29
    $region28: #{mla_forward.1} parent=1 // pred_region
      _
    $region29: #{mla_forward.1} parent=1 // pred_fallthru
      _
    // Predicated region
    $region30: #{mla_forward.1} parent=1 // pred_check
      _
    $region31: #{mla_forward.1} parent=1 // pred_check_branch
      %51 = sbr.rel (0) target = $region33
    $region32: #{mla_forward.1} parent=1 // pred_region
      %s53 = ssub.s32 512, 512
      %54 = vsyncadd [#allocation5], %s53
      %s55 = sshll.u32 [#allocation6], 4
      %s56 = int_to_ptr.vmem [resolvable:$true] %s55
      %61 = dma.hbm_to_vmem [thread:$0]  %s7, 512, %s56, [#allocation5], 64, 64, 4
    $region33: #{mla_forward.1} parent=1 // pred_fallthru
      _
    // Predicated region
    $region34: #{mla_forward.1} parent=1 // pred_check
      _
    $region35: #{mla_forward.1} parent=1 // pred_check_branch
      %63 = sbr.rel (0) target = $region37
    $region36: #{mla_forward.1} parent=1 // pred_region
      _
    $region37: #{mla_forward.1} parent=1 // pred_fallthru
      _
    // Predicated region
    $region38: #{mla_forward.1} parent=1 // pred_check
      _
    $region39: #{mla_forward.1} parent=1 // pred_check_branch
      %65 = sbr.rel (0) target = $region41
    $region40: #{mla_forward.1} parent=1 // pred_region
      %66 = dma.done [#allocation3], 512
    $region41: #{mla_forward.1} parent=1 // pred_fallthru
      _
    // Predicated region
    $region42: #{mla_forward.1} parent=1 // pred_check
      _
    $region43: #{mla_forward.1} parent=1 // pred_check_branch
      %68 = sbr.rel (0) target = $region45
    $region44: #{mla_forward.1} parent=1 // pred_region
      %69 = dma.done [#allocation5], 512
    $region45: #{mla_forward.1} parent=1 // pred_fallthru
      _
    // Predicated region
    $region46: #{mla_forward.1} parent=1 // pred_check
      _
    $region47: #{mla_forward.1} parent=1 // pred_check_branch
      %71 = sbr.rel (0) target = $region49
    $region48: #{mla_forward.1} parent=1 // pred_region
      %72 = dma.done [#allocation5], 512
    $region49: #{mla_forward.1} parent=1 // pred_fallthru
      _
    %v74 = vld [vmem:[%s0] sm:$0xf]
    %v75 = vld [vmem:[%s0 + $0x4] sm:$0x1]
    %v76 = vld [vmem:[%s3] sm:$0xff]
    %v77 = vld [vmem:[%s3 + $0x8] sm:$0xff]
    %v78 = vld [vmem:[%s3 + $0x10] sm:$0xf]
    %v79 = vld [vmem:[%s3 + $0x14] sm:$0xff]
    %v80 = vld [vmem:[%s3 + $0x1c] sm:$0xff]
    %v81 = vld [vmem:[%s3 + $0x24] sm:$0xf]
    %v82 = vld [vmem:[%s3 + $0x28] sm:$0xff]
    %v83 = vld [vmem:[%s3 + $0x30] sm:$0xff]
    %v84 = vld [vmem:[%s3 + $0x38] sm:$0xf]
    %v85 = vld [vmem:[%s3 + $0x3c] sm:$0xff]
    %v86 = vld [vmem:[%s3 + $0x44] sm:$0xff]
    %v87 = vld [vmem:[%s3 + $0x4c] sm:$0xf]
    %v88 = vld [vmem:[%s3 + $0x50] sm:$0xff]
    %v89 = vld [vmem:[%s3 + $0x58] sm:$0xff]
    %v90 = vld [vmem:[%s3 + $0x60] sm:$0xf]
    %v91 = vld [vmem:[%s3 + $0x64] sm:$0xff]
    %v92 = vld [vmem:[%s3 + $0x6c] sm:$0xff]
    %v93 = vld [vmem:[%s3 + $0x74] sm:$0xf]
    %v94 = vld [vmem:[%s3 + $0x78] sm:$0xff]
    %v95 = vld [vmem:[%s3 + $0x80] sm:$0xff]
    %v96 = vld [vmem:[%s3 + $0x88] sm:$0xf]
    %v97 = vld [vmem:[%s3 + $0x8c] sm:$0xff]
    %v98 = vld [vmem:[%s3 + $0x94] sm:$0xff]
    %v99 = vld [vmem:[%s3 + $0x9c] sm:$0xf]
    %v100 = vld [vmem:[%s3 + $0xa0] sm:$0xff]
    %v101 = vld [vmem:[%s3 + $0xa8] sm:$0xff]
    %v102 = vld [vmem:[%s3 + $0xb0] sm:$0xf]
    %v103 = vld [vmem:[%s3 + $0xb4] sm:$0xff]
    %v104 = vld [vmem:[%s3 + $0xbc] sm:$0xff]
    %v105 = vld [vmem:[%s3 + $0xc4] sm:$0xf]
    %v106 = vld [vmem:[%s3 + $0xc8] sm:$0xff]
    %v107 = vld [vmem:[%s3 + $0xd0] sm:$0xff]
    %v108 = vld [vmem:[%s3 + $0xd8] sm:$0xf]
    %v109 = vld [vmem:[%s3 + $0xdc] sm:$0xff]
    %v110 = vld [vmem:[%s3 + $0xe4] sm:$0xff]
    %v111 = vld [vmem:[%s3 + $0xec] sm:$0xf]
    %v112 = vld [vmem:[%s3 + $0xf0] sm:$0xff]
    %v113 = vld [vmem:[%s3 + $0xf8] sm:$0xff]
    %v114 = vld [vmem:[%s3 + $0x100] sm:$0xf]
    %v115 = vld [vmem:[%s3 + $0x104] sm:$0xff]
    %v116 = vld [vmem:[%s3 + $0x10c] sm:$0xff]
    %v117 = vld [vmem:[%s3 + $0x114] sm:$0xf]
    %v118 = vld [vmem:[%s3 + $0x118] sm:$0xff]
    %v119 = vld [vmem:[%s3 + $0x120] sm:$0xff]
    %v120 = vld [vmem:[%s3 + $0x128] sm:$0xf]
    %v121 = vld [vmem:[%s3 + $0x12c] sm:$0xff]
    %v122 = vld [vmem:[%s3 + $0x134] sm:$0xff]
    %v123 = vld [vmem:[%s3 + $0x13c] sm:$0xf]
    %v126 = vunpack.c.l.b16 %v74
    %v127 = vunpack.c.l.b16 %v75
    %v128 = vpack.c.b16 %v127, %v126
    %v178 = vunpack.c.l.b16 %v76
    %v179 = vunpack.c.h.b16 %v76
    %v180 = vunpack.c.l.b16 %v77
    %v181 = vunpack.c.h.b16 %v77
    %v182 = vunpack.c.l.b16 %v78
    %v183 = vunpack.c.l.b16 %v79
    %v184 = vunpack.c.h.b16 %v79
    %v185 = vunpack.c.l.b16 %v80
    %v186 = vunpack.c.h.b16 %v80
    %v187 = vunpack.c.l.b16 %v81
    %v188 = vunpack.c.l.b16 %v82
    %v189 = vunpack.c.h.b16 %v82
    %v190 = vunpack.c.l.b16 %v83
    %v191 = vunpack.c.h.b16 %v83
    %v192 = vunpack.c.l.b16 %v84
    %v193 = vunpack.c.l.b16 %v85
    %v194 = vunpack.c.h.b16 %v85
    %v195 = vunpack.c.l.b16 %v86
    %v196 = vunpack.c.h.b16 %v86
    %v197 = vunpack.c.l.b16 %v87
    %v198 = vunpack.c.l.b16 %v88
    %v199 = vunpack.c.h.b16 %v88
    %v200 = vunpack.c.l.b16 %v89
    %v201 = vunpack.c.h.b16 %v89
    %v202 = vunpack.c.l.b16 %v90
    %v203 = vunpack.c.l.b16 %v91
    %v204 = vunpack.c.h.b16 %v91
    %v205 = vunpack.c.l.b16 %v92
    %v206 = vunpack.c.h.b16 %v92
    %v207 = vunpack.c.l.b16 %v93
    %v208 = vunpack.c.l.b16 %v94
    %v209 = vunpack.c.h.b16 %v94
    %v210 = vunpack.c.l.b16 %v95
    %v211 = vunpack.c.h.b16 %v95
    %v212 = vunpack.c.l.b16 %v96
    %v213 = vunpack.c.l.b16 %v97
    %v214 = vunpack.c.h.b16 %v97
    %v215 = vunpack.c.l.b16 %v98
    %v216 = vunpack.c.h.b16 %v98
    %v217 = vunpack.c.l.b16 %v99
    %v218 = vunpack.c.l.b16 %v100
    %v219 = vunpack.c.h.b16 %v100
    %v220 = vunpack.c.l.b16 %v101
    %v221 = vunpack.c.h.b16 %v101
    %v222 = vunpack.c.l.b16 %v102
    %v223 = vunpack.c.l.b16 %v103
    %v224 = vunpack.c.h.b16 %v103
    %v225 = vunpack.c.l.b16 %v104
    %v226 = vunpack.c.h.b16 %v104
    %v227 = vunpack.c.l.b16 %v105
    %v228 = vunpack.c.l.b16 %v106
    %v229 = vunpack.c.h.b16 %v106
    %v230 = vunpack.c.l.b16 %v107
    %v231 = vunpack.c.h.b16 %v107
    %v232 = vunpack.c.l.b16 %v108
    %v233 = vunpack.c.l.b16 %v109
    %v234 = vunpack.c.h.b16 %v109
    %v235 = vunpack.c.l.b16 %v110
    %v236 = vunpack.c.h.b16 %v110
    %v237 = vunpack.c.l.b16 %v111
    %v238 = vunpack.c.l.b16 %v112
    %v239 = vunpack.c.h.b16 %v112
    %v240 = vunpack.c.l.b16 %v113
    %v241 = vunpack.c.h.b16 %v113
    %v242 = vunpack.c.l.b16 %v114
    %v243 = vunpack.c.l.b16 %v115
    %v244 = vunpack.c.h.b16 %v115
    %v245 = vunpack.c.l.b16 %v116
    %v246 = vunpack.c.h.b16 %v116
    %v247 = vunpack.c.l.b16 %v117
    %v248 = vunpack.c.l.b16 %v118
    %v249 = vunpack.c.h.b16 %v118
    %v250 = vunpack.c.l.b16 %v119
    %v251 = vunpack.c.h.b16 %v119
    %v252 = vunpack.c.l.b16 %v120
    %v253 = vunpack.c.l.b16 %v121
    %v254 = vunpack.c.h.b16 %v121
    %v255 = vunpack.c.l.b16 %v122
    %v256 = vunpack.c.h.b16 %v122
    %v257 = vunpack.c.l.b16 %v123
    %v258 = vpack.c.b16 %v183, %v178
    %v259 = vpack.c.b16 %v184, %v179
    %v260 = vpack.c.b16 %v185, %v180
    %v261 = vpack.c.b16 %v186, %v181
    %v262 = vpack.c.b16 %v187, %v182
    %v263 = vpack.c.b16 %v193, %v188
    %v264 = vpack.c.b16 %v194, %v189
    %v265 = vpack.c.b16 %v195, %v190
    %v266 = vpack.c.b16 %v196, %v191
    %v267 = vpack.c.b16 %v197, %v192
    %v268 = vpack.c.b16 %v203, %v198
    %v269 = vpack.c.b16 %v204, %v199
    %v270 = vpack.c.b16 %v205, %v200
    %v271 = vpack.c.b16 %v206, %v201
    %v272 = vpack.c.b16 %v207, %v202
    %v273 = vpack.c.b16 %v213, %v208
    %v274 = vpack.c.b16 %v214, %v209
    %v275 = vpack.c.b16 %v215, %v210
    %v276 = vpack.c.b16 %v216, %v211
    %v277 = vpack.c.b16 %v217, %v212
    %v278 = vpack.c.b16 %v223, %v218
    %v279 = vpack.c.b16 %v224, %v219
    %v280 = vpack.c.b16 %v225, %v220
    %v281 = vpack.c.b16 %v226, %v221
    %v282 = vpack.c.b16 %v227, %v222
    %v283 = vpack.c.b16 %v233, %v228
    %v284 = vpack.c.b16 %v234, %v229
    %v285 = vpack.c.b16 %v235, %v230
    %v286 = vpack.c.b16 %v236, %v231
    %v287 = vpack.c.b16 %v237, %v232
    %v288 = vpack.c.b16 %v243, %v238
    %v289 = vpack.c.b16 %v244, %v239
    %v290 = vpack.c.b16 %v245, %v240
    %v291 = vpack.c.b16 %v246, %v241
    %v292 = vpack.c.b16 %v247, %v242
    %v293 = vpack.c.b16 %v253, %v248
    %v294 = vpack.c.b16 %v254, %v249
    %v295 = vpack.c.b16 %v255, %v250
    %v296 = vpack.c.b16 %v256, %v251
    %v297 = vpack.c.b16 %v257, %v252
    %338 = vmatprep.subr.bf16.mxu0 %v259
    %339 = vmatpush1.bf16.msra.mxu0 %v258
    %340 = vmatprep.subr.bf16.mxu0 %v264
    %341 = vmatpush1.bf16.msra.mxu0 %v263
    %342 = vmatprep.subr.bf16.mxu0 %v269
    %343 = vmatpush1.bf16.msra.mxu0 %v268
    %344 = vmatprep.subr.bf16.mxu0 %v274
    %345 = vmatpush1.bf16.msra.mxu0 %v273
    %346 = vmatprep.subr.bf16.mxu0 %v279
    %347 = vmatpush1.bf16.msra.mxu0 %v278
    %348 = vmatprep.subr.bf16.mxu0 %v284
    %349 = vmatpush1.bf16.msra.mxu0 %v283
    %350 = vmatprep.subr.bf16.mxu0 %v289
    %351 = vmatpush1.bf16.msra.mxu0 %v288
    %352 = vmatprep.subr.bf16.mxu0 %v294
    %353 = vmatpush1.bf16.msra.mxu0 %v293
    %354 = vmatprep.subr.bf16.mxu0 0
    %355 = vmatpush1.bf16.msra.mxu0 0
    %356 = vmatprep.subr.bf16.mxu0 0
    %357 = vmatpush1.bf16.msra.mxu0 0
    %358 = vmatprep.subr.bf16.mxu0 0
    %359 = vmatpush1.bf16.msra.mxu0 0
    %360 = vmatprep.subr.bf16.mxu0 0
    %361 = vmatpush1.bf16.msra.mxu0 0
    %362 = vmatprep.subr.bf16.mxu0 0
    %363 = vmatpush1.bf16.msra.mxu0 0
    %364 = vmatprep.subr.bf16.mxu0 0
    %365 = vmatpush1.bf16.msra.mxu0 0
    %366 = vmatprep.subr.bf16.mxu0 0
    %367 = vmatpush1.bf16.msra.mxu0 0
    %368 = vmatprep.subr.bf16.mxu0 0
    %369 = vmatpush1.bf16.msra.mxu0 0
    %370 = vmatprep.mubr.bf16.mxu0 0
    %371 = vmatmul.mubr.bf16.gmra.mrb[0].mxu0 %v128
    %v372 = vpop.f32.mrb[0].mxu0
    %v373 = vadd.f32 0.0, %v372
    %v374 = vpop.f32.mrb[0].mxu0
    %v375 = vadd.f32 0.0, %v374
    %v376 = vpop.f32.mrb[0].mxu0
    %v377 = vadd.f32 0.0, %v376
    %v378 = vpop.f32.mrb[0].mxu0
    %v379 = vadd.f32 0.0, %v378
    %380 = vdwg.mxu0
    %381 = vmatprep.subr.bf16.mxu0 %v261
    %382 = vmatpush1.bf16.msra.mxu0 %v260
    %383 = vmatprep.subr.bf16.mxu0 %v266
    %384 = vmatpush1.bf16.msra.mxu0 %v265
    %385 = vmatprep.subr.bf16.mxu0 %v271
    %386 = vmatpush1.bf16.msra.mxu0 %v270
    %387 = vmatprep.subr.bf16.mxu0 %v276
    %388 = vmatpush1.bf16.msra.mxu0 %v275
    %389 = vmatprep.subr.bf16.mxu0 %v281
    %390 = vmatpush1.bf16.msra.mxu0 %v280
    %391 = vmatprep.subr.bf16.mxu0 %v286
    %392 = vmatpush1.bf16.msra.mxu0 %v285
    %393 = vmatprep.subr.bf16.mxu0 %v291
    %394 = vmatpush1.bf16.msra.mxu0 %v290
    %395 = vmatprep.subr.bf16.mxu0 %v296
    %396 = vmatpush1.bf16.msra.mxu0 %v295
    %397 = vmatprep.subr.bf16.mxu0 0
    %398 = vmatpush1.bf16.msra.mxu0 0
    %399 = vmatprep.subr.bf16.mxu0 0
    %400 = vmatpush1.bf16.msra.mxu0 0
    %401 = vmatprep.subr.bf16.mxu0 0
    %402 = vmatpush1.bf16.msra.mxu0 0
    %403 = vmatprep.subr.bf16.mxu0 0
    %404 = vmatpush1.bf16.msra.mxu0 0
    %405 = vmatprep.subr.bf16.mxu0 0
    %406 = vmatpush1.bf16.msra.mxu0 0
    %407 = vmatprep.subr.bf16.mxu0 0
    %408 = vmatpush1.bf16.msra.mxu0 0
    %409 = vmatprep.subr.bf16.mxu0 0
    %410 = vmatpush1.bf16.msra.mxu0 0
    %411 = vmatprep.subr.bf16.mxu0 0
    %412 = vmatpush1.bf16.msra.mxu0 0
    %413 = vmatprep.mubr.bf16.mxu0 0
    %414 = vmatmul.mubr.bf16.gmra.mrb[0].mxu0 %v128
    %v415 = vpop.f32.mrb[0].mxu0
    %v416 = vadd.f32 0.0, %v415
    %v417 = vpop.f32.mrb[0].mxu0
    %v418 = vadd.f32 0.0, %v417
    %v419 = vpop.f32.mrb[0].mxu0
    %v420 = vadd.f32 0.0, %v419
    %v421 = vpop.f32.mrb[0].mxu0
    %v422 = vadd.f32 0.0, %v421
    %423 = vdwg.mxu0
    %424 = vmatprep.subr.bf16.mxu0 0
    %425 = vmatpush1.bf16.msra.mxu0 %v262
    %426 = vmatprep.subr.bf16.mxu0 0
    %427 = vmatpush1.bf16.msra.mxu0 %v267
    %428 = vmatprep.subr.bf16.mxu0 0
    %429 = vmatpush1.bf16.msra.mxu0 %v272
    %430 = vmatprep.subr.bf16.mxu0 0
    %431 = vmatpush1.bf16.msra.mxu0 %v277
    %432 = vmatprep.subr.bf16.mxu0 0
    %433 = vmatpush1.bf16.msra.mxu0 %v282
    %434 = vmatprep.subr.bf16.mxu0 0
    %435 = vmatpush1.bf16.msra.mxu0 %v287
    %436 = vmatprep.subr.bf16.mxu0 0
    %437 = vmatpush1.bf16.msra.mxu0 %v292
    %438 = vmatprep.subr.bf16.mxu0 0
    %439 = vmatpush1.bf16.msra.mxu0 %v297
    %440 = vmatprep.subr.bf16.mxu0 0
    %441 = vmatpush1.bf16.msra.mxu0 0
    %442 = vmatprep.subr.bf16.mxu0 0
    %443 = vmatpush1.bf16.msra.mxu0 0
    %444 = vmatprep.subr.bf16.mxu0 0
    %445 = vmatpush1.bf16.msra.mxu0 0
    %446 = vmatprep.subr.bf16.mxu0 0
    %447 = vmatpush1.bf16.msra.mxu0 0
    %448 = vmatprep.subr.bf16.mxu0 0
    %449 = vmatpush1.bf16.msra.mxu0 0
    %450 = vmatprep.subr.bf16.mxu0 0
    %451 = vmatpush1.bf16.msra.mxu0 0
    %452 = vmatprep.subr.bf16.mxu0 0
    %453 = vmatpush1.bf16.msra.mxu0 0
    %454 = vmatprep.subr.bf16.mxu0 0
    %455 = vmatpush1.bf16.msra.mxu0 0
    %456 = vmatprep.mubr.bf16.mxu0 0
    %457 = vmatmul.mubr.bf16.gmra.mrb[0].mxu0 %v128
    %v458 = vpop.f32.mrb[0].mxu0
    %v459 = vadd.f32 0.0, %v458
    %v460 = vpop.f32.mrb[0].mxu0
    %v461 = vpop.f32.mrb[0].mxu0
    %v462 = vadd.f32 0.0, %v461
    %v463 = vpop.f32.mrb[0].mxu0
    %464 = vdwg.mxu0
    %v465 = vld [vmem:[#allocation2] sm:$0xff]
    %v466 = vld [vmem:[#allocation2 + $0x8] sm:$0xff]
    %v467 = vld [vmem:[#allocation2 + $0x10] sm:$0x3]
    %v468 = vld [vmem:[#allocation2 + $0x18] sm:$0x3]
    %v469 = vmul.f32 %v373, %v465
    %v470 = vmul.f32 %v375, %v466
    %v471 = vmul.f32 %v377, %v467
    %v472 = vmul.f32 %v379, %v468
    %v473 = vld [vmem:[#allocation4] sm:$0xff]
    %v474 = vld [vmem:[#allocation4 + $0x8] sm:$0xff]
    %v475 = vld [vmem:[#allocation4 + $0x10] sm:$0x3]
    %v476 = vld [vmem:[#allocation4 + $0x18] sm:$0x3]
    %v477 = vmul.f32 %v418, %v473
    %v478 = vmul.f32 %v459, %v474
    %v479 = vmul.f32 %v422, %v475
    %v480 = vmul.f32 %v462, %v476
    %v481 = vadd.f32 %v469, %v477
    %v482 = vadd.f32 %v470, %v478
    %v483 = vadd.f32 %v471, %v479
    %v484 = vadd.f32 %v472, %v480
    %v485 = vpack.c.bf16 %v483, %v481
    %v486 = vpack.c.bf16 %v484, %v482
    %v487 = vpack.c.bf16 %v420, %v416
    %v488 = vld [vmem:[%s4] sm:$0xff]
    %v489 = vld [vmem:[%s4 + $0x8] sm:$0xff]
    %v490 = vld [vmem:[%s4 + $0x10] sm:$0xff]
    %v491 = vld [vmem:[%s4 + $0x18] sm:$0xff]
    %v492 = vld [vmem:[%s4 + $0x20] sm:$0xff]
    %v493 = vld [vmem:[%s4 + $0x28] sm:$0xff]
    %v494 = vld [vmem:[%s4 + $0x30] sm:$0xff]
    %v495 = vld [vmem:[%s4 + $0x38] sm:$0xff]
    %v496 = vld [vmem:[%s4 + $0x40] sm:$0xff]
    %v497 = vld [vmem:[%s4 + $0x48] sm:$0xff]
    %v498 = vld [vmem:[%s4 + $0x50] sm:$0xff]
    %v499 = vld [vmem:[%s4 + $0x58] sm:$0xff]
    %v500 = vld [vmem:[%s4 + $0x60] sm:$0xff]
    %v501 = vld [vmem:[%s4 + $0x68] sm:$0xff]
    %v502 = vld [vmem:[%s4 + $0x70] sm:$0xff]
    %v503 = vld [vmem:[%s4 + $0x78] sm:$0xff]
    %v520 = vunpack.c.l.b16 %v488
    %v521 = vunpack.c.h.b16 %v488
    %v522 = vunpack.c.l.b16 %v489
    %v523 = vunpack.c.h.b16 %v489
    %v524 = vunpack.c.l.b16 %v490
    %v525 = vunpack.c.h.b16 %v490
    %v526 = vunpack.c.l.b16 %v491
    %v527 = vunpack.c.h.b16 %v491
    %v528 = vunpack.c.l.b16 %v492
    %v529 = vunpack.c.h.b16 %v492
    %v530 = vunpack.c.l.b16 %v493
    %v531 = vunpack.c.h.b16 %v493
    %v532 = vunpack.c.l.b16 %v494
    %v533 = vunpack.c.h.b16 %v494
    %v534 = vunpack.c.l.b16 %v495
    %v535 = vunpack.c.h.b16 %v495
    %v536 = vunpack.c.l.b16 %v496
    %v537 = vunpack.c.h.b16 %v496
    %v538 = vunpack.c.l.b16 %v497
    %v539 = vunpack.c.h.b16 %v497
    %v540 = vunpack.c.l.b16 %v498
    %v541 = vunpack.c.h.b16 %v498
    %v542 = vunpack.c.l.b16 %v499
    %v543 = vunpack.c.h.b16 %v499
    %v544 = vunpack.c.l.b16 %v500
    %v545 = vunpack.c.h.b16 %v500
    %v546 = vunpack.c.l.b16 %v501
    %v547 = vunpack.c.h.b16 %v501
    %v548 = vunpack.c.l.b16 %v502
    %v549 = vunpack.c.h.b16 %v502
    %v550 = vunpack.c.l.b16 %v503
    %v551 = vunpack.c.h.b16 %v503
    %v552 = vpack.c.b16 %v522, %v520
    %v553 = vpack.c.b16 %v523, %v521
    %v554 = vpack.c.b16 %v526, %v524
    %v555 = vpack.c.b16 %v527, %v525
    %v556 = vpack.c.b16 %v530, %v528
    %v557 = vpack.c.b16 %v531, %v529
    %v558 = vpack.c.b16 %v534, %v532
    %v559 = vpack.c.b16 %v535, %v533
    %v560 = vpack.c.b16 %v538, %v536
    %v561 = vpack.c.b16 %v539, %v537
    %v562 = vpack.c.b16 %v542, %v540
    %v563 = vpack.c.b16 %v543, %v541
    %v564 = vpack.c.b16 %v546, %v544
    %v565 = vpack.c.b16 %v547, %v545
    %v566 = vpack.c.b16 %v550, %v548
    %v567 = vpack.c.b16 %v551, %v549
    %584 = vmatprep.subr.bf16.mxu0 %v553
    %585 = vmatpush1.bf16.msra.mxu0 %v552
    %586 = vmatprep.subr.bf16.mxu0 %v555
    %587 = vmatpush1.bf16.msra.mxu0 %v554
    %588 = vmatprep.subr.bf16.mxu0 %v557
    %589 = vmatpush1.bf16.msra.mxu0 %v556
    %590 = vmatprep.subr.bf16.mxu0 %v559
    %591 = vmatpush1.bf16.msra.mxu0 %v558
    %592 = vmatprep.subr.bf16.mxu0 %v561
    %593 = vmatpush1.bf16.msra.mxu0 %v560
    %594 = vmatprep.subr.bf16.mxu0 %v563
    %595 = vmatpush1.bf16.msra.mxu0 %v562
    %596 = vmatprep.subr.bf16.mxu0 %v565
    %597 = vmatpush1.bf16.msra.mxu0 %v564
    %598 = vmatprep.subr.bf16.mxu0 %v567
    %599 = vmatpush1.bf16.msra.mxu0 %v566
    %600 = vmatprep.subr.bf16.mxu0 0
    %601 = vmatpush1.bf16.msra.mxu0 0
    %602 = vmatprep.subr.bf16.mxu0 0
    %603 = vmatpush1.bf16.msra.mxu0 0
    %604 = vmatprep.subr.bf16.mxu0 0
    %605 = vmatpush1.bf16.msra.mxu0 0
    %606 = vmatprep.subr.bf16.mxu0 0
    %607 = vmatpush1.bf16.msra.mxu0 0
    %608 = vmatprep.subr.bf16.mxu0 0
    %609 = vmatpush1.bf16.msra.mxu0 0
    %610 = vmatprep.subr.bf16.mxu0 0
    %611 = vmatpush1.bf16.msra.mxu0 0
    %612 = vmatprep.subr.bf16.mxu0 0
    %613 = vmatpush1.bf16.msra.mxu0 0
    %614 = vmatprep.subr.bf16.mxu0 0
    %615 = vmatpush1.bf16.msra.mxu0 0
    %616 = vmatprep.mubr.bf16.mxu0 0
    %617 = vmatmul.mubr.bf16.gmra.mrb[0].mxu0 %v485
    %v618 = vpop.f32.mrb[0].mxu0
    %v619 = vadd.f32 0.0, %v618
    %v620 = vpop.f32.mrb[0].mxu0
    %v621 = vadd.f32 0.0, %v620
    %v622 = vpop.f32.mrb[0].mxu0
    %v623 = vadd.f32 0.0, %v622
    %v624 = vpop.f32.mrb[0].mxu0
    %v625 = vadd.f32 0.0, %v624
    %626 = vdwg.mxu0
    %v627 = vld [vmem:[%s5] sm:$0xf]
    %v628 = vld [vmem:[%s5 + $0x4] sm:$0xf]
    %v629 = vld [vmem:[%s5 + $0x8] sm:$0xf]
    %v630 = vld [vmem:[%s5 + $0xc] sm:$0xf]
    %v631 = vld [vmem:[%s5 + $0x10] sm:$0xf]
    %v632 = vld [vmem:[%s5 + $0x14] sm:$0xf]
    %v633 = vld [vmem:[%s5 + $0x18] sm:$0xf]
    %v634 = vld [vmem:[%s5 + $0x1c] sm:$0xf]
    %v635 = vld [vmem:[%s5 + $0x20] sm:$0xf]
    %v636 = vld [vmem:[%s5 + $0x24] sm:$0xf]
    %v637 = vld [vmem:[%s5 + $0x28] sm:$0xf]
    %v638 = vld [vmem:[%s5 + $0x2c] sm:$0xf]
    %v639 = vld [vmem:[%s5 + $0x30] sm:$0xf]
    %v640 = vld [vmem:[%s5 + $0x34] sm:$0xf]
    %v641 = vld [vmem:[%s5 + $0x38] sm:$0xf]
    %v642 = vld [vmem:[%s5 + $0x3c] sm:$0xf]
    %v659 = vunpack.c.l.b16 %v627
    %v660 = vunpack.c.l.b16 %v628
    %v661 = vunpack.c.l.b16 %v629
    %v662 = vunpack.c.l.b16 %v630
    %v663 = vunpack.c.l.b16 %v631
    %v664 = vunpack.c.l.b16 %v632
    %v665 = vunpack.c.l.b16 %v633
    %v666 = vunpack.c.l.b16 %v634
    %v667 = vunpack.c.l.b16 %v635
    %v668 = vunpack.c.l.b16 %v636
    %v669 = vunpack.c.l.b16 %v637
    %v670 = vunpack.c.l.b16 %v638
    %v671 = vunpack.c.l.b16 %v639
    %v672 = vunpack.c.l.b16 %v640
    %v673 = vunpack.c.l.b16 %v641
    %v674 = vunpack.c.l.b16 %v642
    %v675 = vpack.c.b16 %v660, %v659
    %v676 = vpack.c.b16 %v662, %v661
    %v677 = vpack.c.b16 %v664, %v663
    %v678 = vpack.c.b16 %v666, %v665
    %v679 = vpack.c.b16 %v668, %v667
    %v680 = vpack.c.b16 %v670, %v669
    %v681 = vpack.c.b16 %v672, %v671
    %v682 = vpack.c.b16 %v674, %v673
    %691 = vmatprep.subr.bf16.mxu0 0
    %692 = vmatpush1.bf16.msra.mxu0 %v675
    %693 = vmatprep.subr.bf16.mxu0 0
    %694 = vmatpush1.bf16.msra.mxu0 %v676
    %695 = vmatprep.subr.bf16.mxu0 0
    %696 = vmatpush1.bf16.msra.mxu0 %v677
    %697 = vmatprep.subr.bf16.mxu0 0
    %698 = vmatpush1.bf16.msra.mxu0 %v678
    %699 = vmatprep.subr.bf16.mxu0 0
    %700 = vmatpush1.bf16.msra.mxu0 %v679
    %701 = vmatprep.subr.bf16.mxu0 0
    %702 = vmatpush1.bf16.msra.mxu0 %v680
    %703 = vmatprep.subr.bf16.mxu0 0
    %704 = vmatpush1.bf16.msra.mxu0 %v681
    %705 = vmatprep.subr.bf16.mxu0 0
    %706 = vmatpush1.bf16.msra.mxu0 %v682
    %707 = vmatprep.subr.bf16.mxu0 0
    %708 = vmatpush1.bf16.msra.mxu0 0
    %709 = vmatprep.subr.bf16.mxu0 0
    %710 = vmatpush1.bf16.msra.mxu0 0
    %711 = vmatprep.subr.bf16.mxu0 0
    %712 = vmatpush1.bf16.msra.mxu0 0
    %713 = vmatprep.subr.bf16.mxu0 0
    %714 = vmatpush1.bf16.msra.mxu0 0
    %715 = vmatprep.subr.bf16.mxu0 0
    %716 = vmatpush1.bf16.msra.mxu0 0
    %717 = vmatprep.subr.bf16.mxu0 0
    %718 = vmatpush1.bf16.msra.mxu0 0
    %719 = vmatprep.subr.bf16.mxu0 0
    %720 = vmatpush1.bf16.msra.mxu0 0
    %721 = vmatprep.subr.bf16.mxu0 0
    %722 = vmatpush1.bf16.msra.mxu0 0
    %723 = vmatprep.mubr.bf16.mxu0 0
    %724 = vmatmul.mubr.bf16.gmra.mrb[0].mxu0 %v486
    %v725 = vpop.f32.mrb[0].mxu0
    %v726 = vadd.f32 0.0, %v725
    %v727 = vpop.f32.mrb[0].mxu0
    %v728 = vpop.f32.mrb[0].mxu0
    %v729 = vadd.f32 0.0, %v728
    %v730 = vpop.f32.mrb[0].mxu0
    %731 = vdwg.mxu0
    %v732 = vld [vmem:[%s6] sm:$0xf]
    %v733 = vld [vmem:[%s6 + $0x4] sm:$0xf]
    %v734 = vld [vmem:[%s6 + $0x8] sm:$0xf]
    %v735 = vld [vmem:[%s6 + $0xc] sm:$0xf]
    %v736 = vld [vmem:[%s6 + $0x10] sm:$0xf]
    %v737 = vld [vmem:[%s6 + $0x14] sm:$0xf]
    %v738 = vld [vmem:[%s6 + $0x18] sm:$0xf]
    %v739 = vld [vmem:[%s6 + $0x1c] sm:$0xf]
    %v740 = vld [vmem:[%s6 + $0x20] sm:$0xf]
    %v741 = vld [vmem:[%s6 + $0x24] sm:$0xf]
    %v742 = vld [vmem:[%s6 + $0x28] sm:$0xf]
    %v743 = vld [vmem:[%s6 + $0x2c] sm:$0xf]
    %v744 = vld [vmem:[%s6 + $0x30] sm:$0xf]
    %v745 = vld [vmem:[%s6 + $0x34] sm:$0xf]
    %v746 = vld [vmem:[%s6 + $0x38] sm:$0xf]
    %v747 = vld [vmem:[%s6 + $0x3c] sm:$0xf]
    %v764 = vunpack.c.l.b16 %v732
    %v765 = vunpack.c.l.b16 %v733
    %v766 = vunpack.c.l.b16 %v734
    %v767 = vunpack.c.l.b16 %v735
    %v768 = vunpack.c.l.b16 %v736
    %v769 = vunpack.c.l.b16 %v737
    %v770 = vunpack.c.l.b16 %v738
    %v771 = vunpack.c.l.b16 %v739
    %v772 = vunpack.c.l.b16 %v740
    %v773 = vunpack.c.l.b16 %v741
    %v774 = vunpack.c.l.b16 %v742
    %v775 = vunpack.c.l.b16 %v743
    %v776 = vunpack.c.l.b16 %v744
    %v777 = vunpack.c.l.b16 %v745
    %v778 = vunpack.c.l.b16 %v746
    %v779 = vunpack.c.l.b16 %v747
    %v780 = vpack.c.b16 %v765, %v764
    %v781 = vpack.c.b16 %v767, %v766
    %v782 = vpack.c.b16 %v769, %v768
    %v783 = vpack.c.b16 %v771, %v770
    %v784 = vpack.c.b16 %v773, %v772
    %v785 = vpack.c.b16 %v775, %v774
    %v786 = vpack.c.b16 %v777, %v776
    %v787 = vpack.c.b16 %v779, %v778
    %796 = vmatprep.subr.bf16.mxu0 0
    %797 = vmatpush1.bf16.msra.mxu0 %v780
    %798 = vmatprep.subr.bf16.mxu0 0
    %799 = vmatpush1.bf16.msra.mxu0 %v781
    %800 = vmatprep.subr.bf16.mxu0 0
    %801 = vmatpush1.bf16.msra.mxu0 %v782
    %802 = vmatprep.subr.bf16.mxu0 0
    %803 = vmatpush1.bf16.msra.mxu0 %v783
    %804 = vmatprep.subr.bf16.mxu0 0
    %805 = vmatpush1.bf16.msra.mxu0 %v784
    %806 = vmatprep.subr.bf16.mxu0 0
    %807 = vmatpush1.bf16.msra.mxu0 %v785
    %808 = vmatprep.subr.bf16.mxu0 0
    %809 = vmatpush1.bf16.msra.mxu0 %v786
    %810 = vmatprep.subr.bf16.mxu0 0
    %811 = vmatpush1.bf16.msra.mxu0 %v787
    %812 = vmatprep.subr.bf16.mxu0 0
    %813 = vmatpush1.bf16.msra.mxu0 0
    %814 = vmatprep.subr.bf16.mxu0 0
    %815 = vmatpush1.bf16.msra.mxu0 0
    %816 = vmatprep.subr.bf16.mxu0 0
    %817 = vmatpush1.bf16.msra.mxu0 0
    %818 = vmatprep.subr.bf16.mxu0 0
    %819 = vmatpush1.bf16.msra.mxu0 0
    %820 = vmatprep.subr.bf16.mxu0 0
    %821 = vmatpush1.bf16.msra.mxu0 0
    %822 = vmatprep.subr.bf16.mxu0 0
    %823 = vmatpush1.bf16.msra.mxu0 0
    %824 = vmatprep.subr.bf16.mxu0 0
    %825 = vmatpush1.bf16.msra.mxu0 0
    %826 = vmatprep.subr.bf16.mxu0 0
    %827 = vmatpush1.bf16.msra.mxu0 0
    %828 = vmatprep.mubr.bf16.mxu0 0
    %829 = vmatmul.mubr.bf16.gmra.mrb[0].mxu0 %v487
    %v830 = vpop.f32.mrb[0].mxu0
    %v831 = vadd.f32 0.0, %v830
    %v832 = vpop.f32.mrb[0].mxu0
    %v833 = vpop.f32.mrb[0].mxu0
    %v834 = vadd.f32 0.0, %v833
    %v835 = vpop.f32.mrb[0].mxu0
    %836 = vdwg.mxu0
    %v837 = vlaneseq
    %v838 = vshrl.u32 %v837, 7
    %v839 = vadd.s32 %v838, 8
    %v840 = vlaneseq
    %v841 = vand.u32 %v840, 127
    %vm842 = vcmp.ge.s32.totalorder %v838, 0
    %vm843 = vcmp.ge.s32.totalorder %v839, 0
    %vm844 = vcmp.lt.s32.totalorder %v838, 5
    %vm845 = vcmp.lt.s32.totalorder %v839, 5
    %vm846 = vmand %vm842, %vm844
    %vm847 = vmand %vm843, %vm845
    %vm848 = vcmp.ge.s32.totalorder %v841, 0
    %vm849 = vcmp.lt.s32.totalorder %v841, 5
    %vm850 = vmand %vm848, %vm849
    %vm851 = vmand %vm846, %vm850
    %vm852 = vmand %vm847, %vm850
    %vm853 = vcmp.ge.s32.totalorder %v838, 5
    %vm854 = vcmp.ge.s32.totalorder %v839, 5
    %vm855 = vcmp.lt.s32.totalorder %v838, 10
    %vm856 = vcmp.lt.s32.totalorder %v839, 10
    %vm857 = vmand %vm853, %vm855
    %vm858 = vmand %vm854, %vm856
    %vm859 = vcmp.ge.s32.totalorder %v841, 5
    %vm860 = vcmp.lt.s32.totalorder %v841, 10
    %vm861 = vmand %vm859, %vm860
    %vm862 = vmand %vm857, %vm861
    %vm863 = vmand %vm858, %vm861
    %vm864 = vmor %vm851, %vm862
    %vm865 = vmor %vm852, %vm863
    %v866 = vsel %vm864, 0.0, -1e+09
    %v867 = vsel %vm865, 0.0, -1e+09
    %vm868 = vcmask 130048
    %v870 = vsel %vm868, %v621, 0
    %v873 = vsel %vm868, %v625, 0
    %v876 = vsel %vm868, %v726, 0
    %v879 = vsel %vm868, %v729, 0
    %881 = vmatprep.subr.mxu0 0.0
    %882 = vmatpush1.xpose.msra.mxu0 %v876
    %883 = vmatprep.subr.mxu0 0.0
    %884 = vmatpush1.xpose.msra.mxu0 %v879
    %885 = vmatprep.subr.mxu0 0.0
    %886 = vmatpush1.xpose.msra.mxu0 0.0
    %887 = vmatprep.subr.mxu0 0.0
    %888 = vmatpush1.xpose.msra.mxu0 0.0
    %889 = vmatprep.subr.mxu0 0.0
    %890 = vmatpush1.xpose.msra.mxu0 0.0
    %891 = vmatprep.subr.mxu0 0.0
    %892 = vmatpush1.xpose.msra.mxu0 0.0
    %893 = vmatprep.subr.mxu0 0.0
    %894 = vmatpush1.xpose.msra.mxu0 0.0
    %895 = vmatprep.subr.mxu0 0.0
    %896 = vmatpush1.xpose.msra.mxu0 0.0
    %897 = vmatprep.subr.mxu0 0.0
    %898 = vmatpush1.xpose.msra.mxu0 0.0
    %899 = vmatprep.subr.mxu0 0.0
    %900 = vmatpush1.xpose.msra.mxu0 0.0
    %901 = vmatprep.subr.mxu0 0.0
    %902 = vmatpush1.xpose.msra.mxu0 0.0
    %903 = vmatprep.subr.mxu0 0.0
    %904 = vmatpush1.xpose.msra.mxu0 0.0
    %905 = vmatprep.subr.mxu0 0.0
    %906 = vmatpush1.xpose.msra.mxu0 0.0
    %907 = vmatprep.subr.mxu0 0.0
    %908 = vmatpush1.xpose.msra.mxu0 0.0
    %909 = vmatprep.subr.mxu0 0.0
    %910 = vmatpush1.xpose.msra.mxu0 0.0
    %911 = vmatprep.subr.mxu0 0.0
    %912 = vmatpush1.xpose.msra.mxu0 0.0
    %913 = vmatprep.subr.mxu0 0.0
    %914 = vmatpush1.xpose.msra.mxu0 0.0
    %915 = vmatprep.subr.mxu0 0.0
    %916 = vmatpush1.xpose.msra.mxu0 0.0
    %917 = vmatprep.subr.mxu0 0.0
    %918 = vmatpush1.xpose.msra.mxu0 0.0
    %919 = vmatprep.subr.mxu0 0.0
    %920 = vmatpush1.xpose.msra.mxu0 0.0
    %921 = vmatprep.subr.mxu0 0.0
    %922 = vmatpush1.xpose.msra.mxu0 0.0
    %923 = vmatprep.subr.mxu0 0.0
    %924 = vmatpush1.xpose.msra.mxu0 0.0
    %925 = vmatprep.subr.mxu0 0.0
    %926 = vmatpush1.xpose.msra.mxu0 0.0
    %927 = vmatprep.subr.mxu0 0.0
    %928 = vmatpush1.xpose.msra.mxu0 0.0
    %929 = vmatprep.subr.mxu0 0.0
    %930 = vmatpush1.xpose.msra.mxu0 0.0
    %931 = vmatprep.subr.mxu0 0.0
    %932 = vmatpush1.xpose.msra.mxu0 0.0
    %933 = vmatprep.subr.mxu0 0.0
    %934 = vmatpush1.xpose.msra.mxu0 0.0
    %935 = vmatprep.subr.mxu0 0.0
    %936 = vmatpush1.xpose.msra.mxu0 0.0
    %937 = vmatprep.subr.mxu0 0.0
    %938 = vmatpush1.xpose.msra.mxu0 0.0
    %939 = vmatprep.subr.mxu0 0.0
    %940 = vmatpush1.xpose.msra.mxu0 0.0
    %941 = vmatprep.subr.mxu0 0.0
    %942 = vmatpush1.xpose.msra.mxu0 0.0
    %943 = vmatprep.subr.mxu0 0.0
    %944 = vmatpush1.xpose.msra.mxu0 0.0
    %945 = vmatprep.mubr.f32.mxu0 0.0
    %946 = vmatmul.mubr.f32.gmra.mrb[0].mxu0 %v870
    %v947 = vpop.f32.mrb[0].mxu0
    %v948 = vadd.f32 %v866, %v947
    %v949 = vpop.f32.mrb[0].mxu0
    %950 = vmatprep.mubr.f32.mxu0 0.0
    %951 = vmatmul.mubr.f32.gmra.mrb[0].mxu0 %v873
    %v952 = vpop.f32.mrb[0].mxu0
    %v953 = vadd.f32 %v867, %v952
    %v954 = vpop.f32.mrb[0].mxu0
    %955 = vdwg.mxu0
    %vm956 = vcmask 80896
    %v957 = vsel %vm956, %v948, -inf
    %958 = vmax.xlane.f32.xlu0 %v957
    %v959 = vpop.xlane.xlu0 %958
    %vm960 = vcmask 74752
    %v961 = vsel %vm960, %v953, -inf
    %962 = vmax.xlane.f32.xlu0 %v961
    %v963 = vpop.xlane.xlu0 %962
    %v964 = vsub.f32 %v948, %v959
    %v965 = vsub.f32 %v953, %v963
    %v966 = vmul.f32 %v964, 1.442695
    %v967 = vpow.pop %v966
    %v968 = vmul.f32 %v965, 1.442695
    %v969 = vpow.pop %v968
    %v970 = vsel %vm956, %v967, 0.0
    %971 = vadd.xlane.f32.xlu0 %v970
    %v972 = vpop.xlane.xlu0 %971
    %v973 = vsel %vm960, %v969, 0.0
    %974 = vadd.xlane.f32.xlu0 %v973
    %v975 = vpop.xlane.xlu0 %974
    %v976 = vrcp.pop %v972
    %v977 = vrcp.pop %v975
    %v978 = vmul.f32 %v967, %v976
    %v979 = vmul.f32 %v969, %v977
    %v981 = vsel %vm956, %v978, 0
    %v984 = vsel %vm956, %v979, 0
    %vm986 = vcmask 1041408
    %v988 = vsel %vm986, %v834, 0
    %990 = vmatprep.subr.mxu0 0.0
    %991 = vmatpush1.msra.mxu0 %v831
    %992 = vmatprep.subr.mxu0 0.0
    %993 = vmatpush1.msra.mxu0 %v988
    %994 = vmatprep.subr.mxu0 0.0
    %995 = vmatpush1.msra.mxu0 0.0
    %996 = vmatprep.subr.mxu0 0.0
    %997 = vmatpush1.msra.mxu0 0.0
    %998 = vmatprep.subr.mxu0 0.0
    %999 = vmatpush1.msra.mxu0 0.0
    %1000 = vmatprep.subr.mxu0 0.0
    %1001 = vmatpush1.msra.mxu0 0.0
    %1002 = vmatprep.subr.mxu0 0.0
    %1003 = vmatpush1.msra.mxu0 0.0
    %1004 = vmatprep.subr.mxu0 0.0
    %1005 = vmatpush1.msra.mxu0 0.0
    %1006 = vmatprep.subr.mxu0 0.0
    %1007 = vmatpush1.msra.mxu0 0.0
    %1008 = vmatprep.subr.mxu0 0.0
    %1009 = vmatpush1.msra.mxu0 0.0
    %1010 = vmatprep.subr.mxu0 0.0
    %1011 = vmatpush1.msra.mxu0 0.0
    %1012 = vmatprep.subr.mxu0 0.0
    %1013 = vmatpush1.msra.mxu0 0.0
    %1014 = vmatprep.subr.mxu0 0.0
    %1015 = vmatpush1.msra.mxu0 0.0
    %1016 = vmatprep.subr.mxu0 0.0
    %1017 = vmatpush1.msra.mxu0 0.0
    %1018 = vmatprep.subr.mxu0 0.0
    %1019 = vmatpush1.msra.mxu0 0.0
    %1020 = vmatprep.subr.mxu0 0.0
    %1021 = vmatpush1.msra.mxu0 0.0
    %1022 = vmatprep.subr.mxu0 0.0
    %1023 = vmatpush1.msra.mxu0 0.0
    %1024 = vmatprep.subr.mxu0 0.0
    %1025 = vmatpush1.msra.mxu0 0.0
    %1026 = vmatprep.subr.mxu0 0.0
    %1027 = vmatpush1.msra.mxu0 0.0
    %1028 = vmatprep.subr.mxu0 0.0
    %1029 = vmatpush1.msra.mxu0 0.0
    %1030 = vmatprep.subr.mxu0 0.0
    %1031 = vmatpush1.msra.mxu0 0.0
    %1032 = vmatprep.subr.mxu0 0.0
    %1033 = vmatpush1.msra.mxu0 0.0
    %1034 = vmatprep.subr.mxu0 0.0
    %1035 = vmatpush1.msra.mxu0 0.0
    %1036 = vmatprep.subr.mxu0 0.0
    %1037 = vmatpush1.msra.mxu0 0.0
    %1038 = vmatprep.subr.mxu0 0.0
    %1039 = vmatpush1.msra.mxu0 0.0
    %1040 = vmatprep.subr.mxu0 0.0
    %1041 = vmatpush1.msra.mxu0 0.0
    %1042 = vmatprep.subr.mxu0 0.0
    %1043 = vmatpush1.msra.mxu0 0.0
    %1044 = vmatprep.subr.mxu0 0.0
    %1045 = vmatpush1.msra.mxu0 0.0
    %1046 = vmatprep.subr.mxu0 0.0
    %1047 = vmatpush1.msra.mxu0 0.0
    %1048 = vmatprep.subr.mxu0 0.0
    %1049 = vmatpush1.msra.mxu0 0.0
    %1050 = vmatprep.subr.mxu0 0.0
    %1051 = vmatpush1.msra.mxu0 0.0
    %1052 = vmatprep.subr.mxu0 0.0
    %1053 = vmatpush1.msra.mxu0 0.0
    %1054 = vmatprep.mubr.f32.mxu0 0.0
    %1055 = vmatmul.mubr.f32.gmra.mrb[0].mxu0 %v981
    %v1056 = vpop.f32.mrb[0].mxu0
    %v1057 = vadd.f32 0.0, %v1056
    %v1058 = vpop.f32.mrb[0].mxu0
    %1059 = vmatprep.mubr.f32.mxu0 0.0
    %1060 = vmatmul.mubr.f32.gmra.mrb[0].mxu0 %v984
    %v1061 = vpop.f32.mrb[0].mxu0
    %v1062 = vadd.f32 0.0, %v1061
    %v1063 = vpop.f32.mrb[0].mxu0
    %1064 = vdwg.mxu0
    %1065 = vrot.lane.b32.xlu0 %v621, 112
    %v1066 = vpop.permute.xlu0 %1065
    %1067 = vrot.lane.b32.xlu0 %v625, 112
    %v1068 = vpop.permute.xlu0 %1067
    %1069 = vrot.lane.b32.xlu0 %v726, 112
    %v1070 = vpop.permute.xlu0 %1069
    %1071 = vrot.lane.b32.xlu0 %v729, 112
    %v1072 = vpop.permute.xlu0 %1071
    %v1073 = vsel %vm868, %v1066, 0
    %v1075 = vsel %vm868, %v1068, 0
    %v1077 = vsel %vm868, %v1070, 0
    %v1079 = vsel %vm868, %v1072, 0
    %1081 = vmatprep.subr.mxu0 0.0
    %1082 = vmatpush1.xpose.msra.mxu0 %v1077
    %1083 = vmatprep.subr.mxu0 0.0
    %1084 = vmatpush1.xpose.msra.mxu0 %v1079
    %1085 = vmatprep.subr.mxu0 0.0
    %1086 = vmatpush1.xpose.msra.mxu0 0.0
    %1087 = vmatprep.subr.mxu0 0.0
    %1088 = vmatpush1.xpose.msra.mxu0 0.0
    %1089 = vmatprep.subr.mxu0 0.0
    %1090 = vmatpush1.xpose.msra.mxu0 0.0
    %1091 = vmatprep.subr.mxu0 0.0
    %1092 = vmatpush1.xpose.msra.mxu0 0.0
    %1093 = vmatprep.subr.mxu0 0.0
    %1094 = vmatpush1.xpose.msra.mxu0 0.0
    %1095 = vmatprep.subr.mxu0 0.0
    %1096 = vmatpush1.xpose.msra.mxu0 0.0
    %1097 = vmatprep.subr.mxu0 0.0
    %1098 = vmatpush1.xpose.msra.mxu0 0.0
    %1099 = vmatprep.subr.mxu0 0.0
    %1100 = vmatpush1.xpose.msra.mxu0 0.0
    %1101 = vmatprep.subr.mxu0 0.0
    %1102 = vmatpush1.xpose.msra.mxu0 0.0
    %1103 = vmatprep.subr.mxu0 0.0
    %1104 = vmatpush1.xpose.msra.mxu0 0.0
    %1105 = vmatprep.subr.mxu0 0.0
    %1106 = vmatpush1.xpose.msra.mxu0 0.0
    %1107 = vmatprep.subr.mxu0 0.0
    %1108 = vmatpush1.xpose.msra.mxu0 0.0
    %1109 = vmatprep.subr.mxu0 0.0
    %1110 = vmatpush1.xpose.msra.mxu0 0.0
    %1111 = vmatprep.subr.mxu0 0.0
    %1112 = vmatpush1.xpose.msra.mxu0 0.0
    %1113 = vmatprep.subr.mxu0 0.0
    %1114 = vmatpush1.xpose.msra.mxu0 0.0
    %1115 = vmatprep.subr.mxu0 0.0
    %1116 = vmatpush1.xpose.msra.mxu0 0.0
    %1117 = vmatprep.subr.mxu0 0.0
    %1118 = vmatpush1.xpose.msra.mxu0 0.0
    %1119 = vmatprep.subr.mxu0 0.0
    %1120 = vmatpush1.xpose.msra.mxu0 0.0
    %1121 = vmatprep.subr.mxu0 0.0
    %1122 = vmatpush1.xpose.msra.mxu0 0.0
    %1123 = vmatprep.subr.mxu0 0.0
    %1124 = vmatpush1.xpose.msra.mxu0 0.0
    %1125 = vmatprep.subr.mxu0 0.0
    %1126 = vmatpush1.xpose.msra.mxu0 0.0
    %1127 = vmatprep.subr.mxu0 0.0
    %1128 = vmatpush1.xpose.msra.mxu0 0.0
    %1129 = vmatprep.subr.mxu0 0.0
    %1130 = vmatpush1.xpose.msra.mxu0 0.0
    %1131 = vmatprep.subr.mxu0 0.0
    %1132 = vmatpush1.xpose.msra.mxu0 0.0
    %1133 = vmatprep.subr.mxu0 0.0
    %1134 = vmatpush1.xpose.msra.mxu0 0.0
    %1135 = vmatprep.subr.mxu0 0.0
    %1136 = vmatpush1.xpose.msra.mxu0 0.0
    %1137 = vmatprep.subr.mxu0 0.0
    %1138 = vmatpush1.xpose.msra.mxu0 0.0
    %1139 = vmatprep.subr.mxu0 0.0
    %1140 = vmatpush1.xpose.msra.mxu0 0.0
    %1141 = vmatprep.subr.mxu0 0.0
    %1142 = vmatpush1.xpose.msra.mxu0 0.0
    %1143 = vmatprep.subr.mxu0 0.0
    %1144 = vmatpush1.xpose.msra.mxu0 0.0
    %1145 = vmatprep.mubr.f32.mxu0 0.0
    %1146 = vmatmul.mubr.f32.gmra.mrb[0].mxu0 %v1073
    %v1147 = vpop.f32.mrb[0].mxu0
    %v1148 = vadd.f32 %v866, %v1147
    %v1149 = vpop.f32.mrb[0].mxu0
    %1150 = vmatprep.mubr.f32.mxu0 0.0
    %1151 = vmatmul.mubr.f32.gmra.mrb[0].mxu0 %v1075
    %v1152 = vpop.f32.mrb[0].mxu0
    %v1153 = vadd.f32 %v867, %v1152
    %v1154 = vpop.f32.mrb[0].mxu0
    %1155 = vdwg.mxu0
    %v1156 = vsel %vm956, %v1148, -inf
    %1157 = vmax.xlane.f32.xlu0 %v1156
    %v1158 = vpop.xlane.xlu0 %1157
    %v1159 = vsel %vm960, %v1153, -inf
    %1160 = vmax.xlane.f32.xlu0 %v1159
    %v1161 = vpop.xlane.xlu0 %1160
    %v1162 = vsub.f32 %v1148, %v1158
    %v1163 = vsub.f32 %v1153, %v1161
    %v1164 = vmul.f32 %v1162, 1.442695
    %v1165 = vpow.pop %v1164
    %v1166 = vmul.f32 %v1163, 1.442695
    %v1167 = vpow.pop %v1166
    %v1168 = vsel %vm956, %v1165, 0.0
    %1169 = vadd.xlane.f32.xlu0 %v1168
    %v1170 = vpop.xlane.xlu0 %1169
    %v1171 = vsel %vm960, %v1167, 0.0
    %1172 = vadd.xlane.f32.xlu0 %v1171
    %v1173 = vpop.xlane.xlu0 %1172
    %v1174 = vrcp.pop %v1170
    %v1175 = vrcp.pop %v1173
    %v1176 = vmul.f32 %v1165, %v1174
    %v1177 = vmul.f32 %v1167, %v1175
    %1179 = vrot.lane.b32.xlu0 %v831, 112
    %v1180 = vpop.permute.xlu0 %1179
    %1181 = vrot.lane.b32.xlu0 %v834, 112
    %v1182 = vpop.permute.xlu0 %1181
    %v1185 = vsel %vm956, %v1176, 0
    %v1188 = vsel %vm956, %v1177, 0
    %v1190 = vsel %vm986, %v1182, 0
    %1192 = vmatprep.subr.mxu0 0.0
    %1193 = vmatpush1.msra.mxu0 %v1180
    %1194 = vmatprep.subr.mxu0 0.0
    %1195 = vmatpush1.msra.mxu0 %v1190
    %1196 = vmatprep.subr.mxu0 0.0
    %1197 = vmatpush1.msra.mxu0 0.0
    %1198 = vmatprep.subr.mxu0 0.0
    %1199 = vmatpush1.msra.mxu0 0.0
    %1200 = vmatprep.subr.mxu0 0.0
    %1201 = vmatpush1.msra.mxu0 0.0
    %1202 = vmatprep.subr.mxu0 0.0
    %1203 = vmatpush1.msra.mxu0 0.0
    %1204 = vmatprep.subr.mxu0 0.0
    %1205 = vmatpush1.msra.mxu0 0.0
    %1206 = vmatprep.subr.mxu0 0.0
    %1207 = vmatpush1.msra.mxu0 0.0
    %1208 = vmatprep.subr.mxu0 0.0
    %1209 = vmatpush1.msra.mxu0 0.0
    %1210 = vmatprep.subr.mxu0 0.0
    %1211 = vmatpush1.msra.mxu0 0.0
    %1212 = vmatprep.subr.mxu0 0.0
    %1213 = vmatpush1.msra.mxu0 0.0
    %1214 = vmatprep.subr.mxu0 0.0
    %1215 = vmatpush1.msra.mxu0 0.0
    %1216 = vmatprep.subr.mxu0 0.0
    %1217 = vmatpush1.msra.mxu0 0.0
    %1218 = vmatprep.subr.mxu0 0.0
    %1219 = vmatpush1.msra.mxu0 0.0
    %1220 = vmatprep.subr.mxu0 0.0
    %1221 = vmatpush1.msra.mxu0 0.0
    %1222 = vmatprep.subr.mxu0 0.0
    %1223 = vmatpush1.msra.mxu0 0.0
    %1224 = vmatprep.subr.mxu0 0.0
    %1225 = vmatpush1.msra.mxu0 0.0
    %1226 = vmatprep.subr.mxu0 0.0
    %1227 = vmatpush1.msra.mxu0 0.0
    %1228 = vmatprep.subr.mxu0 0.0
    %1229 = vmatpush1.msra.mxu0 0.0
    %1230 = vmatprep.subr.mxu0 0.0
    %1231 = vmatpush1.msra.mxu0 0.0
    %1232 = vmatprep.subr.mxu0 0.0
    %1233 = vmatpush1.msra.mxu0 0.0
    %1234 = vmatprep.subr.mxu0 0.0
    %1235 = vmatpush1.msra.mxu0 0.0
    %1236 = vmatprep.subr.mxu0 0.0
    %1237 = vmatpush1.msra.mxu0 0.0
    %1238 = vmatprep.subr.mxu0 0.0
    %1239 = vmatpush1.msra.mxu0 0.0
    %1240 = vmatprep.subr.mxu0 0.0
    %1241 = vmatpush1.msra.mxu0 0.0
    %1242 = vmatprep.subr.mxu0 0.0
    %1243 = vmatpush1.msra.mxu0 0.0
    %1244 = vmatprep.subr.mxu0 0.0
    %1245 = vmatpush1.msra.mxu0 0.0
    %1246 = vmatprep.subr.mxu0 0.0
    %1247 = vmatpush1.msra.mxu0 0.0
    %1248 = vmatprep.subr.mxu0 0.0
    %1249 = vmatpush1.msra.mxu0 0.0
    %1250 = vmatprep.subr.mxu0 0.0
    %1251 = vmatpush1.msra.mxu0 0.0
    %1252 = vmatprep.subr.mxu0 0.0
    %1253 = vmatpush1.msra.mxu0 0.0
    %1254 = vmatprep.subr.mxu0 0.0
    %1255 = vmatpush1.msra.mxu0 0.0
    %1256 = vmatprep.mubr.f32.mxu0 0.0
    %1257 = vmatmul.mubr.f32.gmra.mrb[0].mxu0 %v1185
    %v1258 = vpop.f32.mrb[0].mxu0
    %v1259 = vadd.f32 0.0, %v1258
    %v1260 = vpop.f32.mrb[0].mxu0
    %1261 = vmatprep.mubr.f32.mxu0 0.0
    %1262 = vmatmul.mubr.f32.gmra.mrb[0].mxu0 %v1188
    %v1263 = vpop.f32.mrb[0].mxu0
    %v1264 = vadd.f32 0.0, %v1263
    %v1265 = vpop.f32.mrb[0].mxu0
    %1266 = vdwg.mxu0
    %1267 = vrot.lane.b32.xlu0 %v621, 96
    %v1268 = vpop.permute.xlu0 %1267
    %1269 = vrot.lane.b32.xlu0 %v625, 96
    %v1270 = vpop.permute.xlu0 %1269
    %1271 = vrot.lane.b32.xlu0 %v726, 96
    %v1272 = vpop.permute.xlu0 %1271
    %1273 = vrot.lane.b32.xlu0 %v729, 96
    %v1274 = vpop.permute.xlu0 %1273
    %v1275 = vsel %vm868, %v1268, 0
    %v1277 = vsel %vm868, %v1270, 0
    %v1279 = vsel %vm868, %v1272, 0
    %v1281 = vsel %vm868, %v1274, 0
    %1283 = vmatprep.subr.mxu0 0.0
    %1284 = vmatpush1.xpose.msra.mxu0 %v1279
    %1285 = vmatprep.subr.mxu0 0.0
    %1286 = vmatpush1.xpose.msra.mxu0 %v1281
    %1287 = vmatprep.subr.mxu0 0.0
    %1288 = vmatpush1.xpose.msra.mxu0 0.0
    %1289 = vmatprep.subr.mxu0 0.0
    %1290 = vmatpush1.xpose.msra.mxu0 0.0
    %1291 = vmatprep.subr.mxu0 0.0
    %1292 = vmatpush1.xpose.msra.mxu0 0.0
    %1293 = vmatprep.subr.mxu0 0.0
    %1294 = vmatpush1.xpose.msra.mxu0 0.0
    %1295 = vmatprep.subr.mxu0 0.0
    %1296 = vmatpush1.xpose.msra.mxu0 0.0
    %1297 = vmatprep.subr.mxu0 0.0
    %1298 = vmatpush1.xpose.msra.mxu0 0.0
    %1299 = vmatprep.subr.mxu0 0.0
    %1300 = vmatpush1.xpose.msra.mxu0 0.0
    %1301 = vmatprep.subr.mxu0 0.0
    %1302 = vmatpush1.xpose.msra.mxu0 0.0
    %1303 = vmatprep.subr.mxu0 0.0
    %1304 = vmatpush1.xpose.msra.mxu0 0.0
    %1305 = vmatprep.subr.mxu0 0.0
    %1306 = vmatpush1.xpose.msra.mxu0 0.0
    %1307 = vmatprep.subr.mxu0 0.0
    %1308 = vmatpush1.xpose.msra.mxu0 0.0
    %1309 = vmatprep.subr.mxu0 0.0
    %1310 = vmatpush1.xpose.msra.mxu0 0.0
    %1311 = vmatprep.subr.mxu0 0.0
    %1312 = vmatpush1.xpose.msra.mxu0 0.0
    %1313 = vmatprep.subr.mxu0 0.0
    %1314 = vmatpush1.xpose.msra.mxu0 0.0
    %1315 = vmatprep.subr.mxu0 0.0
    %1316 = vmatpush1.xpose.msra.mxu0 0.0
    %1317 = vmatprep.subr.mxu0 0.0
    %1318 = vmatpush1.xpose.msra.mxu0 0.0
    %1319 = vmatprep.subr.mxu0 0.0
    %1320 = vmatpush1.xpose.msra.mxu0 0.0
    %1321 = vmatprep.subr.mxu0 0.0
    %1322 = vmatpush1.xpose.msra.mxu0 0.0
    %1323 = vmatprep.subr.mxu0 0.0
    %1324 = vmatpush1.xpose.msra.mxu0 0.0
    %1325 = vmatprep.subr.mxu0 0.0
    %1326 = vmatpush1.xpose.msra.mxu0 0.0
    %1327 = vmatprep.subr.mxu0 0.0
    %1328 = vmatpush1.xpose.msra.mxu0 0.0
    %1329 = vmatprep.subr.mxu0 0.0
    %1330 = vmatpush1.xpose.msra.mxu0 0.0
    %1331 = vmatprep.subr.mxu0 0.0
    %1332 = vmatpush1.xpose.msra.mxu0 0.0
    %1333 = vmatprep.subr.mxu0 0.0
    %1334 = vmatpush1.xpose.msra.mxu0 0.0
    %1335 = vmatprep.subr.mxu0 0.0
    %1336 = vmatpush1.xpose.msra.mxu0 0.0
    %1337 = vmatprep.subr.mxu0 0.0
    %1338 = vmatpush1.xpose.msra.mxu0 0.0
    %1339 = vmatprep.subr.mxu0 0.0
    %1340 = vmatpush1.xpose.msra.mxu0 0.0
    %1341 = vmatprep.subr.mxu0 0.0
    %1342 = vmatpush1.xpose.msra.mxu0 0.0
    %1343 = vmatprep.subr.mxu0 0.0
    %1344 = vmatpush1.xpose.msra.mxu0 0.0
    %1345 = vmatprep.subr.mxu0 0.0
    %1346 = vmatpush1.xpose.msra.mxu0 0.0
    %1347 = vmatprep.mubr.f32.mxu0 0.0
    %1348 = vmatmul.mubr.f32.gmra.mrb[0].mxu0 %v1275
    %v1349 = vpop.f32.mrb[0].mxu0
    %v1350 = vadd.f32 %v866, %v1349
    %v1351 = vpop.f32.mrb[0].mxu0
    %1352 = vmatprep.mubr.f32.mxu0 0.0
    %1353 = vmatmul.mubr.f32.gmra.mrb[0].mxu0 %v1277
    %v1354 = vpop.f32.mrb[0].mxu0
    %v1355 = vadd.f32 %v867, %v1354
    %v1356 = vpop.f32.mrb[0].mxu0
    %1357 = vdwg.mxu0
    %v1358 = vsel %vm956, %v1350, -inf
    %1359 = vmax.xlane.f32.xlu0 %v1358
    %v1360 = vpop.xlane.xlu0 %1359
    %v1361 = vsel %vm960, %v1355, -inf
    %1362 = vmax.xlane.f32.xlu0 %v1361
    %v1363 = vpop.xlane.xlu0 %1362
    %v1364 = vsub.f32 %v1350, %v1360
    %v1365 = vsub.f32 %v1355, %v1363
    %v1366 = vmul.f32 %v1364, 1.442695
    %v1367 = vpow.pop %v1366
    %v1368 = vmul.f32 %v1365, 1.442695
    %v1369 = vpow.pop %v1368
    %v1370 = vsel %vm956, %v1367, 0.0
    %1371 = vadd.xlane.f32.xlu0 %v1370
    %v1372 = vpop.xlane.xlu0 %1371
    %v1373 = vsel %vm960, %v1369, 0.0
    %1374 = vadd.xlane.f32.xlu0 %v1373
    %v1375 = vpop.xlane.xlu0 %1374
    %v1376 = vrcp.pop %v1372
    %v1377 = vrcp.pop %v1375
    %v1378 = vmul.f32 %v1367, %v1376
    %v1379 = vmul.f32 %v1369, %v1377
    %1380 = vrot.lane.b32.xlu0 %v831, 96
    %v1381 = vpop.permute.xlu0 %1380
    %1382 = vrot.lane.b32.xlu0 %v834, 96
    %v1383 = vpop.permute.xlu0 %1382
    %v1386 = vsel %vm956, %v1378, 0
    %v1389 = vsel %vm956, %v1379, 0
    %v1391 = vsel %vm986, %v1383, 0
    %1393 = vmatprep.subr.mxu0 0.0
    %1394 = vmatpush1.msra.mxu0 %v1381
    %1395 = vmatprep.subr.mxu0 0.0
    %1396 = vmatpush1.msra.mxu0 %v1391
    %1397 = vmatprep.subr.mxu0 0.0
    %1398 = vmatpush1.msra.mxu0 0.0
    %1399 = vmatprep.subr.mxu0 0.0
    %1400 = vmatpush1.msra.mxu0 0.0
    %1401 = vmatprep.subr.mxu0 0.0
    %1402 = vmatpush1.msra.mxu0 0.0
    %1403 = vmatprep.subr.mxu0 0.0
    %1404 = vmatpush1.msra.mxu0 0.0
    %1405 = vmatprep.subr.mxu0 0.0
    %1406 = vmatpush1.msra.mxu0 0.0
    %1407 = vmatprep.subr.mxu0 0.0
    %1408 = vmatpush1.msra.mxu0 0.0
    %1409 = vmatprep.subr.mxu0 0.0
    %1410 = vmatpush1.msra.mxu0 0.0
    %1411 = vmatprep.subr.mxu0 0.0
    %1412 = vmatpush1.msra.mxu0 0.0
    %1413 = vmatprep.subr.mxu0 0.0
    %1414 = vmatpush1.msra.mxu0 0.0
    %1415 = vmatprep.subr.mxu0 0.0
    %1416 = vmatpush1.msra.mxu0 0.0
    %1417 = vmatprep.subr.mxu0 0.0
    %1418 = vmatpush1.msra.mxu0 0.0
    %1419 = vmatprep.subr.mxu0 0.0
    %1420 = vmatpush1.msra.mxu0 0.0
    %1421 = vmatprep.subr.mxu0 0.0
    %1422 = vmatpush1.msra.mxu0 0.0
    %1423 = vmatprep.subr.mxu0 0.0
    %1424 = vmatpush1.msra.mxu0 0.0
    %1425 = vmatprep.subr.mxu0 0.0
    %1426 = vmatpush1.msra.mxu0 0.0
    %1427 = vmatprep.subr.mxu0 0.0
    %1428 = vmatpush1.msra.mxu0 0.0
    %1429 = vmatprep.subr.mxu0 0.0
    %1430 = vmatpush1.msra.mxu0 0.0
    %1431 = vmatprep.subr.mxu0 0.0
    %1432 = vmatpush1.msra.mxu0 0.0
    %1433 = vmatprep.subr.mxu0 0.0
    %1434 = vmatpush1.msra.mxu0 0.0
    %1435 = vmatprep.subr.mxu0 0.0
    %1436 = vmatpush1.msra.mxu0 0.0
    %1437 = vmatprep.subr.mxu0 0.0
    %1438 = vmatpush1.msra.mxu0 0.0
    %1439 = vmatprep.subr.mxu0 0.0
    %1440 = vmatpush1.msra.mxu0 0.0
    %1441 = vmatprep.subr.mxu0 0.0
    %1442 = vmatpush1.msra.mxu0 0.0
    %1443 = vmatprep.subr.mxu0 0.0
    %1444 = vmatpush1.msra.mxu0 0.0
    %1445 = vmatprep.subr.mxu0 0.0
    %1446 = vmatpush1.msra.mxu0 0.0
    %1447 = vmatprep.subr.mxu0 0.0
    %1448 = vmatpush1.msra.mxu0 0.0
    %1449 = vmatprep.subr.mxu0 0.0
    %1450 = vmatpush1.msra.mxu0 0.0
    %1451 = vmatprep.subr.mxu0 0.0
    %1452 = vmatpush1.msra.mxu0 0.0
    %1453 = vmatprep.subr.mxu0 0.0
    %1454 = vmatpush1.msra.mxu0 0.0
    %1455 = vmatprep.subr.mxu0 0.0
    %1456 = vmatpush1.msra.mxu0 0.0
    %1457 = vmatprep.mubr.f32.mxu0 0.0
    %1458 = vmatmul.mubr.f32.gmra.mrb[0].mxu0 %v1386
    %v1459 = vpop.f32.mrb[0].mxu0
    %v1460 = vadd.f32 0.0, %v1459
    %v1461 = vpop.f32.mrb[0].mxu0
    %1462 = vmatprep.mubr.f32.mxu0 0.0
    %1463 = vmatmul.mubr.f32.gmra.mrb[0].mxu0 %v1389
    %v1464 = vpop.f32.mrb[0].mxu0
    %v1465 = vadd.f32 0.0, %v1464
    %v1466 = vpop.f32.mrb[0].mxu0
    %1467 = vdwg.mxu0
    %1468 = vrot.lane.b32.xlu0 %v621, 80
    %v1469 = vpop.permute.xlu0 %1468
    %1470 = vrot.lane.b32.xlu0 %v625, 80
    %v1471 = vpop.permute.xlu0 %1470
    %1472 = vrot.lane.b32.xlu0 %v726, 80
    %v1473 = vpop.permute.xlu0 %1472
    %1474 = vrot.lane.b32.xlu0 %v729, 80
    %v1475 = vpop.permute.xlu0 %1474
    %v1476 = vsel %vm868, %v1469, 0
    %v1478 = vsel %vm868, %v1471, 0
    %v1480 = vsel %vm868, %v1473, 0
    %v1482 = vsel %vm868, %v1475, 0
    %1484 = vmatprep.subr.mxu0 0.0
    %1485 = vmatpush1.xpose.msra.mxu0 %v1480
    %1486 = vmatprep.subr.mxu0 0.0
    %1487 = vmatpush1.xpose.msra.mxu0 %v1482
    %1488 = vmatprep.subr.mxu0 0.0
    %1489 = vmatpush1.xpose.msra.mxu0 0.0
    %1490 = vmatprep.subr.mxu0 0.0
    %1491 = vmatpush1.xpose.msra.mxu0 0.0
    %1492 = vmatprep.subr.mxu0 0.0
    %1493 = vmatpush1.xpose.msra.mxu0 0.0
    %1494 = vmatprep.subr.mxu0 0.0
    %1495 = vmatpush1.xpose.msra.mxu0 0.0
    %1496 = vmatprep.subr.mxu0 0.0
    %1497 = vmatpush1.xpose.msra.mxu0 0.0
    %1498 = vmatprep.subr.mxu0 0.0
    %1499 = vmatpush1.xpose.msra.mxu0 0.0
    %1500 = vmatprep.subr.mxu0 0.0
    %1501 = vmatpush1.xpose.msra.mxu0 0.0
    %1502 = vmatprep.subr.mxu0 0.0
    %1503 = vmatpush1.xpose.msra.mxu0 0.0
    %1504 = vmatprep.subr.mxu0 0.0
    %1505 = vmatpush1.xpose.msra.mxu0 0.0
    %1506 = vmatprep.subr.mxu0 0.0
    %1507 = vmatpush1.xpose.msra.mxu0 0.0
    %1508 = vmatprep.subr.mxu0 0.0
    %1509 = vmatpush1.xpose.msra.mxu0 0.0
    %1510 = vmatprep.subr.mxu0 0.0
    %1511 = vmatpush1.xpose.msra.mxu0 0.0
    %1512 = vmatprep.subr.mxu0 0.0
    %1513 = vmatpush1.xpose.msra.mxu0 0.0
    %1514 = vmatprep.subr.mxu0 0.0
    %1515 = vmatpush1.xpose.msra.mxu0 0.0
    %1516 = vmatprep.subr.mxu0 0.0
    %1517 = vmatpush1.xpose.msra.mxu0 0.0
    %1518 = vmatprep.subr.mxu0 0.0
    %1519 = vmatpush1.xpose.msra.mxu0 0.0
    %1520 = vmatprep.subr.mxu0 0.0
    %1521 = vmatpush1.xpose.msra.mxu0 0.0
    %1522 = vmatprep.subr.mxu0 0.0
    %1523 = vmatpush1.xpose.msra.mxu0 0.0
    %1524 = vmatprep.subr.mxu0 0.0
    %1525 = vmatpush1.xpose.msra.mxu0 0.0
    %1526 = vmatprep.subr.mxu0 0.0
    %1527 = vmatpush1.xpose.msra.mxu0 0.0
    %1528 = vmatprep.subr.mxu0 0.0
    %1529 = vmatpush1.xpose.msra.mxu0 0.0
    %1530 = vmatprep.subr.mxu0 0.0
    %1531 = vmatpush1.xpose.msra.mxu0 0.0
    %1532 = vmatprep.subr.mxu0 0.0
    %1533 = vmatpush1.xpose.msra.mxu0 0.0
    %1534 = vmatprep.subr.mxu0 0.0
    %1535 = vmatpush1.xpose.msra.mxu0 0.0
    %1536 = vmatprep.subr.mxu0 0.0
    %1537 = vmatpush1.xpose.msra.mxu0 0.0
    %1538 = vmatprep.subr.mxu0 0.0
    %1539 = vmatpush1.xpose.msra.mxu0 0.0
    %1540 = vmatprep.subr.mxu0 0.0
    %1541 = vmatpush1.xpose.msra.mxu0 0.0
    %1542 = vmatprep.subr.mxu0 0.0
    %1543 = vmatpush1.xpose.msra.mxu0 0.0
    %1544 = vmatprep.subr.mxu0 0.0
    %1545 = vmatpush1.xpose.msra.mxu0 0.0
    %1546 = vmatprep.subr.mxu0 0.0
    %1547 = vmatpush1.xpose.msra.mxu0 0.0
    %1548 = vmatprep.mubr.f32.mxu0 0.0
    %1549 = vmatmul.mubr.f32.gmra.mrb[0].mxu0 %v1476
    %v1550 = vpop.f32.mrb[0].mxu0
    %v1551 = vadd.f32 %v866, %v1550
    %v1552 = vpop.f32.mrb[0].mxu0
    %1553 = vmatprep.mubr.f32.mxu0 0.0
    %1554 = vmatmul.mubr.f32.gmra.mrb[0].mxu0 %v1478
    %v1555 = vpop.f32.mrb[0].mxu0
    %v1556 = vadd.f32 %v867, %v1555
    %v1557 = vpop.f32.mrb[0].mxu0
    %1558 = vdwg.mxu0
    %v1559 = vsel %vm956, %v1551, -inf
    %1560 = vmax.xlane.f32.xlu0 %v1559
    %v1561 = vpop.xlane.xlu0 %1560
    %v1562 = vsel %vm960, %v1556, -inf
    %1563 = vmax.xlane.f32.xlu0 %v1562
    %v1564 = vpop.xlane.xlu0 %1563
    %v1565 = vsub.f32 %v1551, %v1561
    %v1566 = vsub.f32 %v1556, %v1564
    %v1567 = vmul.f32 %v1565, 1.442695
    %v1568 = vpow.pop %v1567
    %v1569 = vmul.f32 %v1566, 1.442695
    %v1570 = vpow.pop %v1569
    %v1571 = vsel %vm956, %v1568, 0.0
    %1572 = vadd.xlane.f32.xlu0 %v1571
    %v1573 = vpop.xlane.xlu0 %1572
    %v1574 = vsel %vm960, %v1570, 0.0
    %1575 = vadd.xlane.f32.xlu0 %v1574
    %v1576 = vpop.xlane.xlu0 %1575
    %v1577 = vrcp.pop %v1573
    %v1578 = vrcp.pop %v1576
    %v1579 = vmul.f32 %v1568, %v1577
    %v1580 = vmul.f32 %v1570, %v1578
    %1581 = vrot.lane.b32.xlu0 %v831, 80
    %v1582 = vpop.permute.xlu0 %1581
    %1583 = vrot.lane.b32.xlu0 %v834, 80
    %v1584 = vpop.permute.xlu0 %1583
    %v1587 = vsel %vm956, %v1579, 0
    %v1590 = vsel %vm956, %v1580, 0
    %v1592 = vsel %vm986, %v1584, 0
    %1594 = vmatprep.subr.mxu0 0.0
    %1595 = vmatpush1.msra.mxu0 %v1582
    %1596 = vmatprep.subr.mxu0 0.0
    %1597 = vmatpush1.msra.mxu0 %v1592
    %1598 = vmatprep.subr.mxu0 0.0
    %1599 = vmatpush1.msra.mxu0 0.0
    %1600 = vmatprep.subr.mxu0 0.0
    %1601 = vmatpush1.msra.mxu0 0.0
    %1602 = vmatprep.subr.mxu0 0.0
    %1603 = vmatpush1.msra.mxu0 0.0
    %1604 = vmatprep.subr.mxu0 0.0
    %1605 = vmatpush1.msra.mxu0 0.0
    %1606 = vmatprep.subr.mxu0 0.0
    %1607 = vmatpush1.msra.mxu0 0.0
    %1608 = vmatprep.subr.mxu0 0.0
    %1609 = vmatpush1.msra.mxu0 0.0
    %1610 = vmatprep.subr.mxu0 0.0
    %1611 = vmatpush1.msra.mxu0 0.0
    %1612 = vmatprep.subr.mxu0 0.0
    %1613 = vmatpush1.msra.mxu0 0.0
    %1614 = vmatprep.subr.mxu0 0.0
    %1615 = vmatpush1.msra.mxu0 0.0
    %1616 = vmatprep.subr.mxu0 0.0
    %1617 = vmatpush1.msra.mxu0 0.0
    %1618 = vmatprep.subr.mxu0 0.0
    %1619 = vmatpush1.msra.mxu0 0.0
    %1620 = vmatprep.subr.mxu0 0.0
    %1621 = vmatpush1.msra.mxu0 0.0
    %1622 = vmatprep.subr.mxu0 0.0
    %1623 = vmatpush1.msra.mxu0 0.0
    %1624 = vmatprep.subr.mxu0 0.0
    %1625 = vmatpush1.msra.mxu0 0.0
    %1626 = vmatprep.subr.mxu0 0.0
    %1627 = vmatpush1.msra.mxu0 0.0
    %1628 = vmatprep.subr.mxu0 0.0
    %1629 = vmatpush1.msra.mxu0 0.0
    %1630 = vmatprep.subr.mxu0 0.0
    %1631 = vmatpush1.msra.mxu0 0.0
    %1632 = vmatprep.subr.mxu0 0.0
    %1633 = vmatpush1.msra.mxu0 0.0
    %1634 = vmatprep.subr.mxu0 0.0
    %1635 = vmatpush1.msra.mxu0 0.0
    %1636 = vmatprep.subr.mxu0 0.0
    %1637 = vmatpush1.msra.mxu0 0.0
    %1638 = vmatprep.subr.mxu0 0.0
    %1639 = vmatpush1.msra.mxu0 0.0
    %1640 = vmatprep.subr.mxu0 0.0
    %1641 = vmatpush1.msra.mxu0 0.0
    %1642 = vmatprep.subr.mxu0 0.0
    %1643 = vmatpush1.msra.mxu0 0.0
    %1644 = vmatprep.subr.mxu0 0.0
    %1645 = vmatpush1.msra.mxu0 0.0
    %1646 = vmatprep.subr.mxu0 0.0
    %1647 = vmatpush1.msra.mxu0 0.0
    %1648 = vmatprep.subr.mxu0 0.0
    %1649 = vmatpush1.msra.mxu0 0.0
    %1650 = vmatprep.subr.mxu0 0.0
    %1651 = vmatpush1.msra.mxu0 0.0
    %1652 = vmatprep.subr.mxu0 0.0
    %1653 = vmatpush1.msra.mxu0 0.0
    %1654 = vmatprep.subr.mxu0 0.0
    %1655 = vmatpush1.msra.mxu0 0.0
    %1656 = vmatprep.subr.mxu0 0.0
    %1657 = vmatpush1.msra.mxu0 0.0
    %1658 = vmatprep.mubr.f32.mxu0 0.0
    %1659 = vmatmul.mubr.f32.gmra.mrb[0].mxu0 %v1587
    %v1660 = vpop.f32.mrb[0].mxu0
    %v1661 = vadd.f32 0.0, %v1660
    %v1662 = vpop.f32.mrb[0].mxu0
    %1663 = vmatprep.mubr.f32.mxu0 0.0
    %1664 = vmatmul.mubr.f32.gmra.mrb[0].mxu0 %v1590
    %v1665 = vpop.f32.mrb[0].mxu0
    %v1666 = vadd.f32 0.0, %v1665
    %v1667 = vpop.f32.mrb[0].mxu0
    %1668 = vdwg.mxu0
    %1671 = vrot.lane.b32.xlu0 %v1259, 16
    %v1672 = vpop.permute.xlu0 %1671
    %1673 = vrot.lane.b32.xlu0 %v1264, 16
    %v1674 = vpop.permute.xlu0 %1673
    %1679 = vrot.lane.b32.xlu0 %v1460, 32
    %v1680 = vpop.permute.xlu0 %1679
    %1681 = vrot.lane.b32.xlu0 %v1465, 32
    %v1682 = vpop.permute.xlu0 %1681
    %1687 = vrot.lane.b32.xlu0 %v1661, 48
    %v1688 = vpop.permute.xlu0 %1687
    %1689 = vrot.lane.b32.xlu0 %v1666, 48
    %v1690 = vpop.permute.xlu0 %1689
    %v1693 = vsel %vm868, %v1057, %v1672
    %v1694 = vsel %vm868, %v1062, %v1674
    %vm1695 = vcmask 261120
    %v1696 = vsel %vm1695, %v1693, %v1680
    %v1697 = vsel %vm1695, %v1694, %v1682
    %vm1698 = vcmask 392192
    %v1699 = vsel %vm1698, %v1696, %v1688
    %v1700 = vsel %vm1698, %v1697, %v1690
    %v1701 = vpack.c.bf16 %v1700, %v1699
    %v1702 = vld [vmem:[#allocation6] sm:$0xf]
    %v1703 = vld [vmem:[#allocation6 + $0x4] sm:$0xf]
    %v1704 = vld [vmem:[#allocation6 + $0x8] sm:$0xf]
    %v1705 = vld [vmem:[#allocation6 + $0xc] sm:$0xf]
    %v1706 = vld [vmem:[#allocation6 + $0x10] sm:$0xf]
    %v1707 = vld [vmem:[#allocation6 + $0x14] sm:$0xf]
    %v1708 = vld [vmem:[#allocation6 + $0x18] sm:$0xf]
    %v1709 = vld [vmem:[#allocation6 + $0x1c] sm:$0xf]
    %v1718 = vunpack.c.l.b16 %v1702
    %v1719 = vunpack.c.l.b16 %v1703
    %v1720 = vunpack.c.l.b16 %v1704
    %v1721 = vunpack.c.l.b16 %v1705
    %v1722 = vunpack.c.l.b16 %v1706
    %v1723 = vunpack.c.l.b16 %v1707
    %v1724 = vunpack.c.l.b16 %v1708
    %v1725 = vunpack.c.l.b16 %v1709
    %v1726 = vpack.c.b16 %v1719, %v1718
    %v1727 = vpack.c.b16 %v1721, %v1720
    %v1728 = vpack.c.b16 %v1723, %v1722
    %v1729 = vpack.c.b16 %v1725, %v1724
    %vm1734 = vcmask 523264
    %v1736 = vsel %vm1734, %v1701, 0
    %1738 = vmatprep.subr.bf16.mxu0 0
    %1739 = vmatpush1.bf16.msra.mxu0 %v1726
    %1740 = vmatprep.subr.bf16.mxu0 0
    %1741 = vmatpush1.bf16.msra.mxu0 %v1727
    %1742 = vmatprep.subr.bf16.mxu0 0
    %1743 = vmatpush1.bf16.msra.mxu0 %v1728
    %1744 = vmatprep.subr.bf16.mxu0 0
    %1745 = vmatpush1.bf16.msra.mxu0 %v1729
    %1746 = vmatprep.subr.bf16.mxu0 0
    %1747 = vmatpush1.bf16.msra.mxu0 0
    %1748 = vmatprep.subr.bf16.mxu0 0
    %1749 = vmatpush1.bf16.msra.mxu0 0
    %1750 = vmatprep.subr.bf16.mxu0 0
    %1751 = vmatpush1.bf16.msra.mxu0 0
    %1752 = vmatprep.subr.bf16.mxu0 0
    %1753 = vmatpush1.bf16.msra.mxu0 0
    %1754 = vmatprep.subr.bf16.mxu0 0
    %1755 = vmatpush1.bf16.msra.mxu0 0
    %1756 = vmatprep.subr.bf16.mxu0 0
    %1757 = vmatpush1.bf16.msra.mxu0 0
    %1758 = vmatprep.subr.bf16.mxu0 0
    %1759 = vmatpush1.bf16.msra.mxu0 0
    %1760 = vmatprep.subr.bf16.mxu0 0
    %1761 = vmatpush1.bf16.msra.mxu0 0
    %1762 = vmatprep.subr.bf16.mxu0 0
    %1763 = vmatpush1.bf16.msra.mxu0 0
    %1764 = vmatprep.subr.bf16.mxu0 0
    %1765 = vmatpush1.bf16.msra.mxu0 0
    %1766 = vmatprep.subr.bf16.mxu0 0
    %1767 = vmatpush1.bf16.msra.mxu0 0
    %1768 = vmatprep.subr.bf16.mxu0 0
    %1769 = vmatpush1.bf16.msra.mxu0 0
    %1770 = vmatprep.mubr.bf16.mxu0 0
    %1771 = vmatmul.mubr.bf16.gmra.mrb[0].mxu0 %v1736
    %v1772 = vpop.f32.mrb[0].mxu0
    %v1773 = vadd.f32 0.0, %v1772
    %v1774 = vpop.f32.mrb[0].mxu0
    %v1775 = vpop.f32.mrb[0].mxu0
    %v1776 = vadd.f32 0.0, %v1775
    %v1777 = vpop.f32.mrb[0].mxu0
    %1778 = vdwg.mxu0
    %v1779 = vxor.u32 %v619, 2147483648
    %v1780 = vxor.u32 %v623, 2147483648
    %v1781 = vmul.f32 %v1779, 1.442695
    %v1782 = vpow.pop %v1781
    %v1783 = vmul.f32 %v1780, 1.442695
    %v1784 = vpow.pop %v1783
    %v1785 = vadd.f32 %v1782, 1.0
    %v1786 = vadd.f32 %v1784, 1.0
    %v1787 = vrcp.pop %v1785
    %v1788 = vmul.f32 1.0, %v1787
    %v1789 = vrcp.pop %v1786
    %v1790 = vmul.f32 1.0, %v1789
    %v1791 = vmul.f32 %v619, %v1788
    %v1792 = vmul.f32 %v623, %v1790
    %v1793 = vmul.f32 %v1791, %v1773
    %v1794 = vmul.f32 %v1792, %v1776
    %v1795 = vpack.c.bf16 %v1794, %v1793
    %v1796 = vld [vmem:[%s8] sm:$0xf]
    %v1797 = vld [vmem:[%s8 + $0x4] sm:$0xf]
    %v1798 = vld [vmem:[%s8 + $0x8] sm:$0xf]
    %v1799 = vld [vmem:[%s8 + $0xc] sm:$0xf]
    %v1800 = vld [vmem:[%s8 + $0x10] sm:$0xf]
    %v1801 = vld [vmem:[%s8 + $0x14] sm:$0xf]
    %v1802 = vld [vmem:[%s8 + $0x18] sm:$0xf]
    %v1803 = vld [vmem:[%s8 + $0x1c] sm:$0xf]
    %v1804 = vld [vmem:[%s8 + $0x20] sm:$0xf]
    %v1805 = vld [vmem:[%s8 + $0x24] sm:$0xf]
    %v1806 = vld [vmem:[%s8 + $0x28] sm:$0xf]
    %v1807 = vld [vmem:[%s8 + $0x2c] sm:$0xf]
    %v1808 = vld [vmem:[%s8 + $0x30] sm:$0xf]
    %v1809 = vld [vmem:[%s8 + $0x34] sm:$0xf]
    %v1810 = vld [vmem:[%s8 + $0x38] sm:$0xf]
    %v1811 = vld [vmem:[%s8 + $0x3c] sm:$0xf]
    %v1828 = vunpack.c.l.b16 %v1796
    %v1829 = vunpack.c.l.b16 %v1797
    %v1830 = vunpack.c.l.b16 %v1798
    %v1831 = vunpack.c.l.b16 %v1799
    %v1832 = vunpack.c.l.b16 %v1800
    %v1833 = vunpack.c.l.b16 %v1801
    %v1834 = vunpack.c.l.b16 %v1802
    %v1835 = vunpack.c.l.b16 %v1803
    %v1836 = vunpack.c.l.b16 %v1804
    %v1837 = vunpack.c.l.b16 %v1805
    %v1838 = vunpack.c.l.b16 %v1806
    %v1839 = vunpack.c.l.b16 %v1807
    %v1840 = vunpack.c.l.b16 %v1808
    %v1841 = vunpack.c.l.b16 %v1809
    %v1842 = vunpack.c.l.b16 %v1810
    %v1843 = vunpack.c.l.b16 %v1811
    %v1844 = vpack.c.b16 %v1829, %v1828
    %v1845 = vpack.c.b16 %v1831, %v1830
    %v1846 = vpack.c.b16 %v1833, %v1832
    %v1847 = vpack.c.b16 %v1835, %v1834
    %v1848 = vpack.c.b16 %v1837, %v1836
    %v1849 = vpack.c.b16 %v1839, %v1838
    %v1850 = vpack.c.b16 %v1841, %v1840
    %v1851 = vpack.c.b16 %v1843, %v1842
    %1860 = vmatprep.subr.bf16.mxu0 0
    %1861 = vmatpush1.bf16.msra.mxu0 %v1844
    %1862 = vmatprep.subr.bf16.mxu0 0
    %1863 = vmatpush1.bf16.msra.mxu0 %v1845
    %1864 = vmatprep.subr.bf16.mxu0 0
    %1865 = vmatpush1.bf16.msra.mxu0 %v1846
    %1866 = vmatprep.subr.bf16.mxu0 0
    %1867 = vmatpush1.bf16.msra.mxu0 %v1847
    %1868 = vmatprep.subr.bf16.mxu0 0
    %1869 = vmatpush1.bf16.msra.mxu0 %v1848
    %1870 = vmatprep.subr.bf16.mxu0 0
    %1871 = vmatpush1.bf16.msra.mxu0 %v1849
    %1872 = vmatprep.subr.bf16.mxu0 0
    %1873 = vmatpush1.bf16.msra.mxu0 %v1850
    %1874 = vmatprep.subr.bf16.mxu0 0
    %1875 = vmatpush1.bf16.msra.mxu0 %v1851
    %1876 = vmatprep.subr.bf16.mxu0 0
    %1877 = vmatpush1.bf16.msra.mxu0 0
    %1878 = vmatprep.subr.bf16.mxu0 0
    %1879 = vmatpush1.bf16.msra.mxu0 0
    %1880 = vmatprep.subr.bf16.mxu0 0
    %1881 = vmatpush1.bf16.msra.mxu0 0
    %1882 = vmatprep.subr.bf16.mxu0 0
    %1883 = vmatpush1.bf16.msra.mxu0 0
    %1884 = vmatprep.subr.bf16.mxu0 0
    %1885 = vmatpush1.bf16.msra.mxu0 0
    %1886 = vmatprep.subr.bf16.mxu0 0
    %1887 = vmatpush1.bf16.msra.mxu0 0
    %1888 = vmatprep.subr.bf16.mxu0 0
    %1889 = vmatpush1.bf16.msra.mxu0 0
    %1890 = vmatprep.subr.bf16.mxu0 0
    %1891 = vmatpush1.bf16.msra.mxu0 0
    %1892 = vmatprep.mubr.bf16.mxu0 0
    %1893 = vmatmul.mubr.bf16.gmra.mrb[0].mxu0 %v1795
    %v1894 = vpop.f32.mrb[0].mxu0
    %v1895 = vadd.f32 0.0, %v1894
    %v1896 = vpop.f32.mrb[0].mxu0
    %v1897 = vpop.f32.mrb[0].mxu0
    %v1898 = vadd.f32 0.0, %v1897
    %v1899 = vpop.f32.mrb[0].mxu0
    %1900 = vdwg.mxu0
    %1901 = vst [vmem:[%s9] sm:$0xff] %v1895
    %1902 = vst [vmem:[%s9 + $0x8] sm:$0x3] %v1898
    // Predicated region
    $region50: #{mla_forward.1} parent=1 // pred_check
      _
    $region51: #{mla_forward.1} parent=1 // pred_check_branch
      %1904 = sbr.rel (0) target = $region53
    $region52: #{mla_forward.1} parent=1 // pred_region
      _
    $region53: #{mla_forward.1} parent=1 // pred_fallthru
      _
    // Predicated region
    $region54: #{mla_forward.1} parent=1 // pred_check
      _
    $region55: #{mla_forward.1} parent=1 // pred_check_branch
      %1906 = sbr.rel (0) target = $region57
    $region56: #{mla_forward.1} parent=1 // pred_region
      _
    $region57: #{mla_forward.1} parent=1 // pred_fallthru
      _
    %1907 = vsyncpa [#allocation3], 1
    %1908 = vsyncpa [#allocation5], 1

</llo_original>
